<compile_context>
chip_gen: v6e
topology: v6e:2x2x1
jax: 0.10.0
libtpu: 0.0.40
codegen_flags: <defaults>
</compile_context>

<pallas_src>
import jax
import jax.numpy as jnp
from jax.experimental import pallas as pl
from jax.experimental.pallas import tpu as pltpu


# ----------------------------- Pallas kernel -------------------------------

def _make_deconv8_kernel(th, cout, kh, wl):
    """Kernel over one (n, h-tile) block.

    xe_ref : (1, th, Cin*KW, 8W)   block-diag expanded input rows
    lhs_ref: (Cout*KH, Cin*KW)     rearranged weight
    b_ref  : (Cout*KH, 1)          per-(co,kh) bias
    o_ref  : (1, Cout, th*KH, 8W)  slab of the final NCHW output
    """
    def kernel(xe_ref, lhs_ref, b_ref, o_ref):
        lhs = lhs_ref[...]
        b = b_ref[...]
        for r in range(th):  # static unroll; th is small (<= 64)
            y = jnp.dot(lhs, xe_ref[0, r], preferred_element_type=jnp.float32)
            y = y + b                                   # (Cout*KH, 8W)
            o_ref[0, :, r * kh:(r + 1) * kh, :] = (
                y.reshape(cout, kh, wl).astype(o_ref.dtype))
    return kernel


# ------------------------------- wrapper ------------------------------------

def upblock8(x_nchw, weight, bias, *, out_dtype=None,
             tile_out_bytes=2 * 1024 * 1024):
    """ConvTranspose2d(kernel_size=8, stride=8, padding=0) forward.

    x_nchw: (N, Cin, H, W)
    weight: (Cin, Cout, 8, 8)  -- PyTorch ConvTranspose2d weight layout
    bias:   (Cout,)
    returns (N, Cout, 8*H, 8*W)
    """
    N, Cin, H, W = x_nchw.shape
    cin_w, Cout, KH, KW = weight.shape
    assert cin_w == Cin
    out_dtype = out_dtype or x_nchw.dtype

    WL = W * KW                  # output width == lane extent of a block
    CoutKH = Cout * KH
    CinKW = Cin * KW

    # LHS: lhs[co*KH+kh, ci*KW+kw] = weight[ci, co, kh, kw]
    lhs = jnp.transpose(weight, (1, 2, 0, 3)).reshape(CoutKH, CinKW)
    lhs = lhs.astype(jnp.float32)
    # Bias per output row (co, kh); broadcast over lanes inside the kernel.
    b2 = jnp.repeat(bias.astype(jnp.float32), KH).reshape(CoutKH, 1)

    # Block-diag (over kw) expansion of the input so one matmul lands directly
    # in depth-to-space order:  xe[n, h, ci*KW+k, w*KW+l] = x[n,ci,h,w]*d(k,l).
    # Size = output_bytes / 8  ->  cheap vs. the transpose pass it removes.
    xt = jnp.transpose(x_nchw, (0, 2, 1, 3)).astype(jnp.float32)   # (N,H,Cin,W)
    eye = jnp.eye(KW, dtype=jnp.float32)
    xe = jnp.einsum('nhcw,kl->nhckwl', xt, eye).reshape(N, H, CinKW, WL)

    # Pick th = rows of H per grid step: largest divisor of H whose output tile
    # stays under the byte budget (and <= 64 to bound unrolling).
    row_bytes = Cout * KH * WL * jnp.dtype(out_dtype).itemsize
    th = 1
    for cand in range(1, H + 1):
        if H % cand == 0 and cand <= 64 and cand * row_bytes <= tile_out_bytes:
            th = cand

    grid = (N, H // th)
    out_shape = jax.ShapeDtypeStruct((N, Cout, H * KH, W * KW), out_dtype)

    out_bytes = N * Cout * H * KH * W * KW * jnp.dtype(out_dtype).itemsize
    flops = 2 * N * H * CoutKH * CinKW * WL
    bytes_accessed = int(4 * (xe.size + lhs.size + b2.size) + out_bytes)

    kernel = _make_deconv8_kernel(th, Cout, KH, WL)

    return pl.pallas_call(
        kernel,
        out_shape=out_shape,
        grid=grid,
        in_specs=[
            pl.BlockSpec((1, th, CinKW, WL), lambda n, hb: (n, hb, 0, 0)),
            pl.BlockSpec((CoutKH, CinKW), lambda n, hb: (0, 0)),
            pl.BlockSpec((CoutKH, 1), lambda n, hb: (0, 0)),
        ],
        out_specs=pl.BlockSpec((1, Cout, th * KH, WL),
                               lambda n, hb: (n, 0, hb, 0)),
        compiler_params=pltpu.CompilerParams(
            dimension_semantics=("parallel", "parallel"),
            vmem_limit_bytes=32 * 1024 * 1024),
        cost_estimate=pl.CostEstimate(
            flops=flops, transcendentals=0, bytes_accessed=bytes_accessed),
    )(xe, lhs, b2)


# --------------------------- pure-JAX reference -----------------------------

def upblock8_ref(x, weight, bias):
    N, Cin, H, W = x.shape
    _, Cout, KH, KW = weight.shape
    y = jnp.einsum('nchw,cokl->nohkwl', x, weight)     # (N, Cout, H, KH, W, KW)
    y = y.reshape(N, Cout, H * KH, W * KW)
    return y + bias.reshape(1, Cout, 1, 1)


# ---------------------------------- main ------------------------------------

if __name__ == "__main__":
    key = jax.random.PRNGKey(0)
    N, Cin, H, W = 2, 4, 16, 16
    Cout, K = 8, 8
    k0, k1, k2 = jax.random.split(key, 3)

    x = jax.random.normal(k0, (N, Cin, H, W), jnp.float32)
    weight = 0.1 * jax.random.normal(k1, (Cin, Cout, K, K), jnp.float32)
    bias = 0.05 * jax.random.normal(k2, (Cout,), jnp.float32)

    out = jax.block_until_ready(upblock8(x, weight, bias))
    ref = jax.block_until_ready(upblock8_ref(x, weight, bias))

    assert out.shape == (N, Cout, H * K, W * K), out.shape
    assert jnp.allclose(out, ref, atol=1e-4, rtol=1e-4), float(
        jnp.max(jnp.abs(out - ref)))
    print("KERNEL_OK")
</pallas_src>

<mosaic_0001>
module attributes {stable_mosaic.version = 11 : i64} {
  func.func @kernel(%arg0: i32, %arg1: i32, %arg2: memref<1x16x32x128xf32, #tpu.memory_space<vmem>>, %arg3: memref<64x32xf32, #tpu.memory_space<vmem>>, %arg4: memref<64x1xf32, #tpu.memory_space<vmem>>, %arg5: memref<1x8x128x128xf32, #tpu.memory_space<vmem>>) attributes {dimension_semantics = [#tpu.dimension_semantics<parallel>, #tpu.dimension_semantics<parallel>], iteration_bounds = array<i64: 2, 1>, scalar_prefetch = 0 : i64, scratch_operands = 0 : i64, tpu.core_type = #tpu.core_type<tc>, window_params = [{transform_indices = @transform_0, window_bounds = array<i64: 1, 16, 32, 128>}, {pipeline_mode = #tpu.pipeline_mode<synchronous>, transform_indices = @transform_1, window_bounds = array<i64: 64, 32>}, {pipeline_mode = #tpu.pipeline_mode<synchronous>, transform_indices = @transform_2, window_bounds = array<i64: 64, 1>}, {transform_indices = @transform_3, window_bounds = array<i64: 1, 8, 128, 128>}]} {
    %c0 = arith.constant 0 : index
    %c0_0 = arith.constant 0 : index
    %0 = vector.load %arg3[%c0, %c0_0] : memref<64x32xf32, #tpu.memory_space<vmem>>, vector<64x32xf32>
    %c0_1 = arith.constant 0 : index
    %c0_2 = arith.constant 0 : index
    %1 = vector.load %arg4[%c0_1, %c0_2] : memref<64x1xf32, #tpu.memory_space<vmem>>, vector<64x1xf32>
    %c0_3 = arith.constant 0 : index
    %c0_4 = arith.constant 0 : index
    %c0_5 = arith.constant 0 : index
    %c0_6 = arith.constant 0 : index
    %2 = vector.load %arg2[%c0_3, %c0_4, %c0_5, %c0_6] : memref<1x16x32x128xf32, #tpu.memory_space<vmem>>, vector<1x1x32x128xf32>
    %3 = vector.shape_cast %2 : vector<1x1x32x128xf32> to vector<32x128xf32>
    %cst = arith.constant dense<0.000000e+00> : vector<64x128xf32>
    %4 = tpu.matmul %0, %3, %cst {dimension_numbers = #tpu.dot_dimension_numbers<[1], [0], [0], [1], [0, 0, 1, 1], [], []>} : vector<64x32xf32>, vector<32x128xf32>, vector<64x128xf32> -> vector<64x128xf32>
    %5 = vector.broadcast %1 : vector<64x1xf32> to vector<64x128xf32>
    %6 = arith.addf %4, %5 : vector<64x128xf32>
    %7 = vector.shape_cast %6 : vector<64x128xf32> to vector<8x8x128xf32>
    %c0_7 = arith.constant 0 : index
    %c0_8 = arith.constant 0 : index
    %c0_9 = arith.constant 0 : index
    %c0_10 = arith.constant 0 : index
    %8 = vector.load %arg5[%c0_7, %c0_8, %c0_9, %c0_10] : memref<1x8x128x128xf32, #tpu.memory_space<vmem>>, vector<1x8x8x128xf32>
    %9 = vector.shape_cast %8 : vector<1x8x8x128xf32> to vector<8x8x128xf32>
    %10 = vector.shape_cast %7 : vector<8x8x128xf32> to vector<1x8x8x128xf32>
    tpu.vector_store %arg5[%c0_7, %c0_8, %c0_9, %c0_10], %10 {strides = array<i32>} : memref<1x8x128x128xf32, #tpu.memory_space<vmem>>, vector<1x8x8x128xf32>,
    %c0_11 = arith.constant 0 : index
    %c1 = arith.constant 1 : index
    %c0_12 = arith.constant 0 : index
    %c0_13 = arith.constant 0 : index
    %11 = vector.load %arg2[%c0_11, %c1, %c0_12, %c0_13] : memref<1x16x32x128xf32, #tpu.memory_space<vmem>>, vector<1x1x32x128xf32>
    %12 = vector.shape_cast %11 : vector<1x1x32x128xf32> to vector<32x128xf32>
    %cst_14 = arith.constant dense<0.000000e+00> : vector<64x128xf32>
    %13 = tpu.matmul %0, %12, %cst_14 {dimension_numbers = #tpu.dot_dimension_numbers<[1], [0], [0], [1], [0, 0, 1, 1], [], []>} : vector<64x32xf32>, vector<32x128xf32>, vector<64x128xf32> -> vector<64x128xf32>
    %14 = vector.broadcast %1 : vector<64x1xf32> to vector<64x128xf32>
    %15 = arith.addf %13, %14 : vector<64x128xf32>
    %16 = vector.shape_cast %15 : vector<64x128xf32> to vector<8x8x128xf32>
    %c0_15 = arith.constant 0 : index
    %c0_16 = arith.constant 0 : index
    %c8 = arith.constant 8 : index
    %c0_17 = arith.constant 0 : index
    %17 = vector.load %arg5[%c0_15, %c0_16, %c8, %c0_17] : memref<1x8x128x128xf32, #tpu.memory_space<vmem>>, vector<1x8x8x128xf32>
    %18 = vector.shape_cast %17 : vector<1x8x8x128xf32> to vector<8x8x128xf32>
    %19 = vector.shape_cast %16 : vector<8x8x128xf32> to vector<1x8x8x128xf32>
    tpu.vector_store %arg5[%c0_15, %c0_16, %c8, %c0_17], %19 {strides = array<i32>} : memref<1x8x128x128xf32, #tpu.memory_space<vmem>>, vector<1x8x8x128xf32>,
    %c0_18 = arith.constant 0 : index
    %c2 = arith.constant 2 : index
    %c0_19 = arith.constant 0 : index
    %c0_20 = arith.constant 0 : index
    %20 = vector.load %arg2[%c0_18, %c2, %c0_19, %c0_20] : memref<1x16x32x128xf32, #tpu.memory_space<vmem>>, vector<1x1x32x128xf32>
    %21 = vector.shape_cast %20 : vector<1x1x32x128xf32> to vector<32x128xf32>
    %cst_21 = arith.constant dense<0.000000e+00> : vector<64x128xf32>
    %22 = tpu.matmul %0, %21, %cst_21 {dimension_numbers = #tpu.dot_dimension_numbers<[1], [0], [0], [1], [0, 0, 1, 1], [], []>} : vector<64x32xf32>, vector<32x128xf32>, vector<64x128xf32> -> vector<64x128xf32>
    %23 = vector.broadcast %1 : vector<64x1xf32> to vector<64x128xf32>
    %24 = arith.addf %22, %23 : vector<64x128xf32>
    %25 = vector.shape_cast %24 : vector<64x128xf32> to vector<8x8x128xf32>
    %c0_22 = arith.constant 0 : index
    %c0_23 = arith.constant 0 : index
    %c16 = arith.constant 16 : index
    %c0_24 = arith.constant 0 : index
    %26 = vector.load %arg5[%c0_22, %c0_23, %c16, %c0_24] : memref<1x8x128x128xf32, #tpu.memory_space<vmem>>, vector<1x8x8x128xf32>
    %27 = vector.shape_cast %26 : vector<1x8x8x128xf32> to vector<8x8x128xf32>
    %28 = vector.shape_cast %25 : vector<8x8x128xf32> to vector<1x8x8x128xf32>
    tpu.vector_store %arg5[%c0_22, %c0_23, %c16, %c0_24], %28 {strides = array<i32>} : memref<1x8x128x128xf32, #tpu.memory_space<vmem>>, vector<1x8x8x128xf32>,
    %c0_25 = arith.constant 0 : index
    %c3 = arith.constant 3 : index
    %c0_26 = arith.constant 0 : index
    %c0_27 = arith.constant 0 : index
    %29 = vector.load %arg2[%c0_25, %c3, %c0_26, %c0_27] : memref<1x16x32x128xf32, #tpu.memory_space<vmem>>, vector<1x1x32x128xf32>
    %30 = vector.shape_cast %29 : vector<1x1x32x128xf32> to vector<32x128xf32>
    %cst_28 = arith.constant dense<0.000000e+00> : vector<64x128xf32>
    %31 = tpu.matmul %0, %30, %cst_28 {dimension_numbers = #tpu.dot_dimension_numbers<[1], [0], [0], [1], [0, 0, 1, 1], [], []>} : vector<64x32xf32>, vector<32x128xf32>, vector<64x128xf32> -> vector<64x128xf32>
    %32 = vector.broadcast %1 : vector<64x1xf32> to vector<64x128xf32>
    %33 = arith.addf %31, %32 : vector<64x128xf32>
    %34 = vector.shape_cast %33 : vector<64x128xf32> to vector<8x8x128xf32>
    %c0_29 = arith.constant 0 : index
    %c0_30 = arith.constant 0 : index
    %c24 = arith.constant 24 : index
    %c0_31 = arith.constant 0 : index
    %35 = vector.load %arg5[%c0_29, %c0_30, %c24, %c0_31] : memref<1x8x128x128xf32, #tpu.memory_space<vmem>>, vector<1x8x8x128xf32>
    %36 = vector.shape_cast %35 : vector<1x8x8x128xf32> to vector<8x8x128xf32>
    %37 = vector.shape_cast %34 : vector<8x8x128xf32> to vector<1x8x8x128xf32>
    tpu.vector_store %arg5[%c0_29, %c0_30, %c24, %c0_31], %37 {strides = array<i32>} : memref<1x8x128x128xf32, #tpu.memory_space<vmem>>, vector<1x8x8x128xf32>,
    %c0_32 = arith.constant 0 : index
    %c4 = arith.constant 4 : index
    %c0_33 = arith.constant 0 : index
    %c0_34 = arith.constant 0 : index
    %38 = vector.load %arg2[%c0_32, %c4, %c0_33, %c0_34] : memref<1x16x32x128xf32, #tpu.memory_space<vmem>>, vector<1x1x32x128xf32>
    %39 = vector.shape_cast %38 : vector<1x1x32x128xf32> to vector<32x128xf32>
    %cst_35 = arith.constant dense<0.000000e+00> : vector<64x128xf32>
    %40 = tpu.matmul %0, %39, %cst_35 {dimension_numbers = #tpu.dot_dimension_numbers<[1], [0], [0], [1], [0, 0, 1, 1], [], []>} : vector<64x32xf32>, vector<32x128xf32>, vector<64x128xf32> -> vector<64x128xf32>
    %41 = vector.broadcast %1 : vector<64x1xf32> to vector<64x128xf32>
    %42 = arith.addf %40, %41 : vector<64x128xf32>
    %43 = vector.shape_cast %42 : vector<64x128xf32> to vector<8x8x128xf32>
    %c0_36 = arith.constant 0 : index
    %c0_37 = arith.constant 0 : index
    %c32 = arith.constant 32 : index
    %c0_38 = arith.constant 0 : index
    %44 = vector.load %arg5[%c0_36, %c0_37, %c32, %c0_38] : memref<1x8x128x128xf32, #tpu.memory_space<vmem>>, vector<1x8x8x128xf32>
    %45 = vector.shape_cast %44 : vector<1x8x8x128xf32> to vector<8x8x128xf32>
    %46 = vector.shape_cast %43 : vector<8x8x128xf32> to vector<1x8x8x128xf32>
    tpu.vector_store %arg5[%c0_36, %c0_37, %c32, %c0_38], %46 {strides = array<i32>} : memref<1x8x128x128xf32, #tpu.memory_space<vmem>>, vector<1x8x8x128xf32>,
    %c0_39 = arith.constant 0 : index
    %c5 = arith.constant 5 : index
    %c0_40 = arith.constant 0 : index
    %c0_41 = arith.constant 0 : index
    %47 = vector.load %arg2[%c0_39, %c5, %c0_40, %c0_41] : memref<1x16x32x128xf32, #tpu.memory_space<vmem>>, vector<1x1x32x128xf32>
    %48 = vector.shape_cast %47 : vector<1x1x32x128xf32> to vector<32x128xf32>
    %cst_42 = arith.constant dense<0.000000e+00> : vector<64x128xf32>
    %49 = tpu.matmul %0, %48, %cst_42 {dimension_numbers = #tpu.dot_dimension_numbers<[1], [0], [0], [1], [0, 0, 1, 1], [], []>} : vector<64x32xf32>, vector<32x128xf32>, vector<64x128xf32> -> vector<64x128xf32>
    %50 = vector.broadcast %1 : vector<64x1xf32> to vector<64x128xf32>
    %51 = arith.addf %49, %50 : vector<64x128xf32>
    %52 = vector.shape_cast %51 : vector<64x128xf32> to vector<8x8x128xf32>
    %c0_43 = arith.constant 0 : index
    %c0_44 = arith.constant 0 : index
    %c40 = arith.constant 40 : index
    %c0_45 = arith.constant 0 : index
    %53 = vector.load %arg5[%c0_43, %c0_44, %c40, %c0_45] : memref<1x8x128x128xf32, #tpu.memory_space<vmem>>, vector<1x8x8x128xf32>
    %54 = vector.shape_cast %53 : vector<1x8x8x128xf32> to vector<8x8x128xf32>
    %55 = vector.shape_cast %52 : vector<8x8x128xf32> to vector<1x8x8x128xf32>
    tpu.vector_store %arg5[%c0_43, %c0_44, %c40, %c0_45], %55 {strides = array<i32>} : memref<1x8x128x128xf32, #tpu.memory_space<vmem>>, vector<1x8x8x128xf32>,
    %c0_46 = arith.constant 0 : index
    %c6 = arith.constant 6 : index
    %c0_47 = arith.constant 0 : index
    %c0_48 = arith.constant 0 : index
    %56 = vector.load %arg2[%c0_46, %c6, %c0_47, %c0_48] : memref<1x16x32x128xf32, #tpu.memory_space<vmem>>, vector<1x1x32x128xf32>
    %57 = vector.shape_cast %56 : vector<1x1x32x128xf32> to vector<32x128xf32>
    %cst_49 = arith.constant dense<0.000000e+00> : vector<64x128xf32>
    %58 = tpu.matmul %0, %57, %cst_49 {dimension_numbers = #tpu.dot_dimension_numbers<[1], [0], [0], [1], [0, 0, 1, 1], [], []>} : vector<64x32xf32>, vector<32x128xf32>, vector<64x128xf32> -> vector<64x128xf32>
    %59 = vector.broadcast %1 : vector<64x1xf32> to vector<64x128xf32>
    %60 = arith.addf %58, %59 : vector<64x128xf32>
    %61 = vector.shape_cast %60 : vector<64x128xf32> to vector<8x8x128xf32>
    %c0_50 = arith.constant 0 : index
    %c0_51 = arith.constant 0 : index
    %c48 = arith.constant 48 : index
    %c0_52 = arith.constant 0 : index
    %62 = vector.load %arg5[%c0_50, %c0_51, %c48, %c0_52] : memref<1x8x128x128xf32, #tpu.memory_space<vmem>>, vector<1x8x8x128xf32>
    %63 = vector.shape_cast %62 : vector<1x8x8x128xf32> to vector<8x8x128xf32>
    %64 = vector.shape_cast %61 : vector<8x8x128xf32> to vector<1x8x8x128xf32>
    tpu.vector_store %arg5[%c0_50, %c0_51, %c48, %c0_52], %64 {strides = array<i32>} : memref<1x8x128x128xf32, #tpu.memory_space<vmem>>, vector<1x8x8x128xf32>,
    %c0_53 = arith.constant 0 : index
    %c7 = arith.constant 7 : index
    %c0_54 = arith.constant 0 : index
    %c0_55 = arith.constant 0 : index
    %65 = vector.load %arg2[%c0_53, %c7, %c0_54, %c0_55] : memref<1x16x32x128xf32, #tpu.memory_space<vmem>>, vector<1x1x32x128xf32>
    %66 = vector.shape_cast %65 : vector<1x1x32x128xf32> to vector<32x128xf32>
    %cst_56 = arith.constant dense<0.000000e+00> : vector<64x128xf32>
    %67 = tpu.matmul %0, %66, %cst_56 {dimension_numbers = #tpu.dot_dimension_numbers<[1], [0], [0], [1], [0, 0, 1, 1], [], []>} : vector<64x32xf32>, vector<32x128xf32>, vector<64x128xf32> -> vector<64x128xf32>
    %68 = vector.broadcast %1 : vector<64x1xf32> to vector<64x128xf32>
    %69 = arith.addf %67, %68 : vector<64x128xf32>
    %70 = vector.shape_cast %69 : vector<64x128xf32> to vector<8x8x128xf32>
    %c0_57 = arith.constant 0 : index
    %c0_58 = arith.constant 0 : index
    %c56 = arith.constant 56 : index
    %c0_59 = arith.constant 0 : index
    %71 = vector.load %arg5[%c0_57, %c0_58, %c56, %c0_59] : memref<1x8x128x128xf32, #tpu.memory_space<vmem>>, vector<1x8x8x128xf32>
    %72 = vector.shape_cast %71 : vector<1x8x8x128xf32> to vector<8x8x128xf32>
    %73 = vector.shape_cast %70 : vector<8x8x128xf32> to vector<1x8x8x128xf32>
    tpu.vector_store %arg5[%c0_57, %c0_58, %c56, %c0_59], %73 {strides = array<i32>} : memref<1x8x128x128xf32, #tpu.memory_space<vmem>>, vector<1x8x8x128xf32>,
    %c0_60 = arith.constant 0 : index
    %c8_61 = arith.constant 8 : index
    %c0_62 = arith.constant 0 : index
    %c0_63 = arith.constant 0 : index
    %74 = vector.load %arg2[%c0_60, %c8_61, %c0_62, %c0_63] : memref<1x16x32x128xf32, #tpu.memory_space<vmem>>, vector<1x1x32x128xf32>
    %75 = vector.shape_cast %74 : vector<1x1x32x128xf32> to vector<32x128xf32>
    %cst_64 = arith.constant dense<0.000000e+00> : vector<64x128xf32>
    %76 = tpu.matmul %0, %75, %cst_64 {dimension_numbers = #tpu.dot_dimension_numbers<[1], [0], [0], [1], [0, 0, 1, 1], [], []>} : vector<64x32xf32>, vector<32x128xf32>, vector<64x128xf32> -> vector<64x128xf32>
    %77 = vector.broadcast %1 : vector<64x1xf32> to vector<64x128xf32>
    %78 = arith.addf %76, %77 : vector<64x128xf32>
    %79 = vector.shape_cast %78 : vector<64x128xf32> to vector<8x8x128xf32>
    %c0_65 = arith.constant 0 : index
    %c0_66 = arith.constant 0 : index
    %c64 = arith.constant 64 : index
    %c0_67 = arith.constant 0 : index
    %80 = vector.load %arg5[%c0_65, %c0_66, %c64, %c0_67] : memref<1x8x128x128xf32, #tpu.memory_space<vmem>>, vector<1x8x8x128xf32>
    %81 = vector.shape_cast %80 : vector<1x8x8x128xf32> to vector<8x8x128xf32>
    %82 = vector.shape_cast %79 : vector<8x8x128xf32> to vector<1x8x8x128xf32>
    tpu.vector_store %arg5[%c0_65, %c0_66, %c64, %c0_67], %82 {strides = array<i32>} : memref<1x8x128x128xf32, #tpu.memory_space<vmem>>, vector<1x8x8x128xf32>,
    %c0_68 = arith.constant 0 : index
    %c9 = arith.constant 9 : index
    %c0_69 = arith.constant 0 : index
    %c0_70 = arith.constant 0 : index
    %83 = vector.load %arg2[%c0_68, %c9, %c0_69, %c0_70] : memref<1x16x32x128xf32, #tpu.memory_space<vmem>>, vector<1x1x32x128xf32>
    %84 = vector.shape_cast %83 : vector<1x1x32x128xf32> to vector<32x128xf32>
    %cst_71 = arith.constant dense<0.000000e+00> : vector<64x128xf32>
    %85 = tpu.matmul %0, %84, %cst_71 {dimension_numbers = #tpu.dot_dimension_numbers<[1], [0], [0], [1], [0, 0, 1, 1], [], []>} : vector<64x32xf32>, vector<32x128xf32>, vector<64x128xf32> -> vector<64x128xf32>
    %86 = vector.broadcast %1 : vector<64x1xf32> to vector<64x128xf32>
    %87 = arith.addf %85, %86 : vector<64x128xf32>
    %88 = vector.shape_cast %87 : vector<64x128xf32> to vector<8x8x128xf32>
    %c0_72 = arith.constant 0 : index
    %c0_73 = arith.constant 0 : index
    %c72 = arith.constant 72 : index
    %c0_74 = arith.constant 0 : index
    %89 = vector.load %arg5[%c0_72, %c0_73, %c72, %c0_74] : memref<1x8x128x128xf32, #tpu.memory_space<vmem>>, vector<1x8x8x128xf32>
    %90 = vector.shape_cast %89 : vector<1x8x8x128xf32> to vector<8x8x128xf32>
    %91 = vector.shape_cast %88 : vector<8x8x128xf32> to vector<1x8x8x128xf32>
    tpu.vector_store %arg5[%c0_72, %c0_73, %c72, %c0_74], %91 {strides = array<i32>} : memref<1x8x128x128xf32, #tpu.memory_space<vmem>>, vector<1x8x8x128xf32>,
    %c0_75 = arith.constant 0 : index
    %c10 = arith.constant 10 : index
    %c0_76 = arith.constant 0 : index
    %c0_77 = arith.constant 0 : index
    %92 = vector.load %arg2[%c0_75, %c10, %c0_76, %c0_77] : memref<1x16x32x128xf32, #tpu.memory_space<vmem>>, vector<1x1x32x128xf32>
    %93 = vector.shape_cast %92 : vector<1x1x32x128xf32> to vector<32x128xf32>
    %cst_78 = arith.constant dense<0.000000e+00> : vector<64x128xf32>
    %94 = tpu.matmul %0, %93, %cst_78 {dimension_numbers = #tpu.dot_dimension_numbers<[1], [0], [0], [1], [0, 0, 1, 1], [], []>} : vector<64x32xf32>, vector<32x128xf32>, vector<64x128xf32> -> vector<64x128xf32>
    %95 = vector.broadcast %1 : vector<64x1xf32> to vector<64x128xf32>
    %96 = arith.addf %94, %95 : vector<64x128xf32>
    %97 = vector.shape_cast %96 : vector<64x128xf32> to vector<8x8x128xf32>
    %c0_79 = arith.constant 0 : index
    %c0_80 = arith.constant 0 : index
    %c80 = arith.constant 80 : index
    %c0_81 = arith.constant 0 : index
    %98 = vector.load %arg5[%c0_79, %c0_80, %c80, %c0_81] : memref<1x8x128x128xf32, #tpu.memory_space<vmem>>, vector<1x8x8x128xf32>
    %99 = vector.shape_cast %98 : vector<1x8x8x128xf32> to vector<8x8x128xf32>
    %100 = vector.shape_cast %97 : vector<8x8x128xf32> to vector<1x8x8x128xf32>
    tpu.vector_store %arg5[%c0_79, %c0_80, %c80, %c0_81], %100 {strides = array<i32>} : memref<1x8x128x128xf32, #tpu.memory_space<vmem>>, vector<1x8x8x128xf32>,
    %c0_82 = arith.constant 0 : index
    %c11 = arith.constant 11 : index
    %c0_83 = arith.constant 0 : index
    %c0_84 = arith.constant 0 : index
    %101 = vector.load %arg2[%c0_82, %c11, %c0_83, %c0_84] : memref<1x16x32x128xf32, #tpu.memory_space<vmem>>, vector<1x1x32x128xf32>
    %102 = vector.shape_cast %101 : vector<1x1x32x128xf32> to vector<32x128xf32>
    %cst_85 = arith.constant dense<0.000000e+00> : vector<64x128xf32>
    %103 = tpu.matmul %0, %102, %cst_85 {dimension_numbers = #tpu.dot_dimension_numbers<[1], [0], [0], [1], [0, 0, 1, 1], [], []>} : vector<64x32xf32>, vector<32x128xf32>, vector<64x128xf32> -> vector<64x128xf32>
    %104 = vector.broadcast %1 : vector<64x1xf32> to vector<64x128xf32>
    %105 = arith.addf %103, %104 : vector<64x128xf32>
    %106 = vector.shape_cast %105 : vector<64x128xf32> to vector<8x8x128xf32>
    %c0_86 = arith.constant 0 : index
    %c0_87 = arith.constant 0 : index
    %c88 = arith.constant 88 : index
    %c0_88 = arith.constant 0 : index
    %107 = vector.load %arg5[%c0_86, %c0_87, %c88, %c0_88] : memref<1x8x128x128xf32, #tpu.memory_space<vmem>>, vector<1x8x8x128xf32>
    %108 = vector.shape_cast %107 : vector<1x8x8x128xf32> to vector<8x8x128xf32>
    %109 = vector.shape_cast %106 : vector<8x8x128xf32> to vector<1x8x8x128xf32>
    tpu.vector_store %arg5[%c0_86, %c0_87, %c88, %c0_88], %109 {strides = array<i32>} : memref<1x8x128x128xf32, #tpu.memory_space<vmem>>, vector<1x8x8x128xf32>,
    %c0_89 = arith.constant 0 : index
    %c12 = arith.constant 12 : index
    %c0_90 = arith.constant 0 : index
    %c0_91 = arith.constant 0 : index
    %110 = vector.load %arg2[%c0_89, %c12, %c0_90, %c0_91] : memref<1x16x32x128xf32, #tpu.memory_space<vmem>>, vector<1x1x32x128xf32>
    %111 = vector.shape_cast %110 : vector<1x1x32x128xf32> to vector<32x128xf32>
    %cst_92 = arith.constant dense<0.000000e+00> : vector<64x128xf32>
    %112 = tpu.matmul %0, %111, %cst_92 {dimension_numbers = #tpu.dot_dimension_numbers<[1], [0], [0], [1], [0, 0, 1, 1], [], []>} : vector<64x32xf32>, vector<32x128xf32>, vector<64x128xf32> -> vector<64x128xf32>
    %113 = vector.broadcast %1 : vector<64x1xf32> to vector<64x128xf32>
    %114 = arith.addf %112, %113 : vector<64x128xf32>
    %115 = vector.shape_cast %114 : vector<64x128xf32> to vector<8x8x128xf32>
    %c0_93 = arith.constant 0 : index
    %c0_94 = arith.constant 0 : index
    %c96 = arith.constant 96 : index
    %c0_95 = arith.constant 0 : index
    %116 = vector.load %arg5[%c0_93, %c0_94, %c96, %c0_95] : memref<1x8x128x128xf32, #tpu.memory_space<vmem>>, vector<1x8x8x128xf32>
    %117 = vector.shape_cast %116 : vector<1x8x8x128xf32> to vector<8x8x128xf32>
    %118 = vector.shape_cast %115 : vector<8x8x128xf32> to vector<1x8x8x128xf32>
    tpu.vector_store %arg5[%c0_93, %c0_94, %c96, %c0_95], %118 {strides = array<i32>} : memref<1x8x128x128xf32, #tpu.memory_space<vmem>>, vector<1x8x8x128xf32>,
    %c0_96 = arith.constant 0 : index
    %c13 = arith.constant 13 : index
    %c0_97 = arith.constant 0 : index
    %c0_98 = arith.constant 0 : index
    %119 = vector.load %arg2[%c0_96, %c13, %c0_97, %c0_98] : memref<1x16x32x128xf32, #tpu.memory_space<vmem>>, vector<1x1x32x128xf32>
    %120 = vector.shape_cast %119 : vector<1x1x32x128xf32> to vector<32x128xf32>
    %cst_99 = arith.constant dense<0.000000e+00> : vector<64x128xf32>
    %121 = tpu.matmul %0, %120, %cst_99 {dimension_numbers = #tpu.dot_dimension_numbers<[1], [0], [0], [1], [0, 0, 1, 1], [], []>} : vector<64x32xf32>, vector<32x128xf32>, vector<64x128xf32> -> vector<64x128xf32>
    %122 = vector.broadcast %1 : vector<64x1xf32> to vector<64x128xf32>
    %123 = arith.addf %121, %122 : vector<64x128xf32>
    %124 = vector.shape_cast %123 : vector<64x128xf32> to vector<8x8x128xf32>
    %c0_100 = arith.constant 0 : index
    %c0_101 = arith.constant 0 : index
    %c104 = arith.constant 104 : index
    %c0_102 = arith.constant 0 : index
    %125 = vector.load %arg5[%c0_100, %c0_101, %c104, %c0_102] : memref<1x8x128x128xf32, #tpu.memory_space<vmem>>, vector<1x8x8x128xf32>
    %126 = vector.shape_cast %125 : vector<1x8x8x128xf32> to vector<8x8x128xf32>
    %127 = vector.shape_cast %124 : vector<8x8x128xf32> to vector<1x8x8x128xf32>
    tpu.vector_store %arg5[%c0_100, %c0_101, %c104, %c0_102], %127 {strides = array<i32>} : memref<1x8x128x128xf32, #tpu.memory_space<vmem>>, vector<1x8x8x128xf32>,
    %c0_103 = arith.constant 0 : index
    %c14 = arith.constant 14 : index
    %c0_104 = arith.constant 0 : index
    %c0_105 = arith.constant 0 : index
    %128 = vector.load %arg2[%c0_103, %c14, %c0_104, %c0_105] : memref<1x16x32x128xf32, #tpu.memory_space<vmem>>, vector<1x1x32x128xf32>
    %129 = vector.shape_cast %128 : vector<1x1x32x128xf32> to vector<32x128xf32>
    %cst_106 = arith.constant dense<0.000000e+00> : vector<64x128xf32>
    %130 = tpu.matmul %0, %129, %cst_106 {dimension_numbers = #tpu.dot_dimension_numbers<[1], [0], [0], [1], [0, 0, 1, 1], [], []>} : vector<64x32xf32>, vector<32x128xf32>, vector<64x128xf32> -> vector<64x128xf32>
    %131 = vector.broadcast %1 : vector<64x1xf32> to vector<64x128xf32>
    %132 = arith.addf %130, %131 : vector<64x128xf32>
    %133 = vector.shape_cast %132 : vector<64x128xf32> to vector<8x8x128xf32>
    %c0_107 = arith.constant 0 : index
    %c0_108 = arith.constant 0 : index
    %c112 = arith.constant 112 : index
    %c0_109 = arith.constant 0 : index
    %134 = vector.load %arg5[%c0_107, %c0_108, %c112, %c0_109] : memref<1x8x128x128xf32, #tpu.memory_space<vmem>>, vector<1x8x8x128xf32>
    %135 = vector.shape_cast %134 : vector<1x8x8x128xf32> to vector<8x8x128xf32>
    %136 = vector.shape_cast %133 : vector<8x8x128xf32> to vector<1x8x8x128xf32>
    tpu.vector_store %arg5[%c0_107, %c0_108, %c112, %c0_109], %136 {strides = array<i32>} : memref<1x8x128x128xf32, #tpu.memory_space<vmem>>, vector<1x8x8x128xf32>,
    %c0_110 = arith.constant 0 : index
    %c15 = arith.constant 15 : index
    %c0_111 = arith.constant 0 : index
    %c0_112 = arith.constant 0 : index
    %137 = vector.load %arg2[%c0_110, %c15, %c0_111, %c0_112] : memref<1x16x32x128xf32, #tpu.memory_space<vmem>>, vector<1x1x32x128xf32>
    %138 = vector.shape_cast %137 : vector<1x1x32x128xf32> to vector<32x128xf32>
    %cst_113 = arith.constant dense<0.000000e+00> : vector<64x128xf32>
    %139 = tpu.matmul %0, %138, %cst_113 {dimension_numbers = #tpu.dot_dimension_numbers<[1], [0], [0], [1], [0, 0, 1, 1], [], []>} : vector<64x32xf32>, vector<32x128xf32>, vector<64x128xf32> -> vector<64x128xf32>
    %140 = vector.broadcast %1 : vector<64x1xf32> to vector<64x128xf32>
    %141 = arith.addf %139, %140 : vector<64x128xf32>
    %142 = vector.shape_cast %141 : vector<64x128xf32> to vector<8x8x128xf32>
    %c0_114 = arith.constant 0 : index
    %c0_115 = arith.constant 0 : index
    %c120 = arith.constant 120 : index
    %c0_116 = arith.constant 0 : index
    %143 = vector.load %arg5[%c0_114, %c0_115, %c120, %c0_116] : memref<1x8x128x128xf32, #tpu.memory_space<vmem>>, vector<1x8x8x128xf32>
    %144 = vector.shape_cast %143 : vector<1x8x8x128xf32> to vector<8x8x128xf32>
    %145 = vector.shape_cast %142 : vector<8x8x128xf32> to vector<1x8x8x128xf32>
    tpu.vector_store %arg5[%c0_114, %c0_115, %c120, %c0_116], %145 {strides = array<i32>} : memref<1x8x128x128xf32, #tpu.memory_space<vmem>>, vector<1x8x8x128xf32>,
    return
  }
  func.func @transform_0(%arg0: i32, %arg1: i32) -> (i32, i32, i32, i32) {
    %c0_i32 = arith.constant 0 : i32
    %c0_i32_0 = arith.constant 0 : i32
    %c0_i32_1 = arith.constant 0 : i32
    return %arg0, %arg1, %c0_i32, %c0_i32_0 : i32, i32, i32, i32
  }
  func.func @transform_1(%arg0: i32, %arg1: i32) -> (i32, i32) {
    %c0_i32 = arith.constant 0 : i32
    %c0_i32_0 = arith.constant 0 : i32
    %c0_i32_1 = arith.constant 0 : i32
    return %c0_i32, %c0_i32_0 : i32, i32
  }
  func.func @transform_2(%arg0: i32, %arg1: i32) -> (i32, i32) {
    %c0_i32 = arith.constant 0 : i32
    %c0_i32_0 = arith.constant 0 : i32
    %c0_i32_1 = arith.constant 0 : i32
    return %c0_i32, %c0_i32_0 : i32, i32
  }
  func.func @transform_3(%arg0: i32, %arg1: i32) -> (i32, i32, i32, i32) {
    %c0_i32 = arith.constant 0 : i32
    %c0_i32_0 = arith.constant 0 : i32
    %c0_i32_1 = arith.constant 0 : i32
    return %arg0, %c0_i32, %arg1, %c0_i32_0 : i32, i32, i32, i32
  }
}

</mosaic_0001>

<llo_original>
// kernel: tpu_custom_call.1
$region0: #{tpu_custom_call.1}
  #allocation0 [shape = 'u32[]', space=smem, size = 0x4, offset = 0x4, fixed_abs, tag = 'smem constant byte address 0x4 - core index']
  #allocation1 [shape = 'u32[144,128]{1,0:T(1,128)}', space=vmem, size = 0x12000, scoped, tag = 'internal scratch']
  %s0 = inlined_call_operand.hbm [shape: f32[2,16,32,128], index: 0, kind: input, shape index: {}]
  %s1 = inlined_call_operand.vmem [shape: f32[64,32], index: 1, kind: input, shape index: {}]
  %s2 = inlined_call_operand.vmem [shape: f32[64,1], index: 2, kind: input, shape index: {}]
  %s3 = inlined_call_operand.hbm [shape: f32[2,8,128,128], index: 3, kind: output, shape index: {}]
  %s4 = sld [smem:[#allocation0]]
  $region49: #{tpu_custom_call.1} parent=0
    _
  %s6 = ssub.s32 1, %s4
  %s7 = scalar_select 0, %s6, %s4
  $region1: #{tpu_custom_call.1} parent=0
    #allocation2 [shape = 'u8[524288]{0}', space=vmem, size = 0x80000, scoped, tag = 'input window, operand 0']
    #allocation3 [shape = 's32[2]{0}', space=sflag, size = 0x8, scoped, tag = 'scoped memory for tpu_custom_call.1']
    #allocation4 [shape = 's32[2]{0}', space=sflag, size = 0x8, scoped, tag = 'scoped memory for tpu_custom_call.1']
    #allocation5 [shape = 'u8[1048576]{0}', space=vmem, size = 0x100000, scoped, tag = 'output window, operand 0']
    %8 = vsyncpa [#allocation3], 0
    %s9 = scalar_lea.sflag [#allocation3], 1
    %10 = vsyncpa %s9, 0
    %11 = vsyncpa [#allocation4], 0
    %s12 = scalar_lea.sflag [#allocation4], 1
    %13 = vsyncpa %s12, 0
    loop: start=0, step=1, limit=4
    $region2: #{tpu_custom_call.1} parent=1 // loop_pre_header
      _
    $region3: #{tpu_custom_call.1} parent=1 // loop_header
      %s15 = sphi 0, %s19
      %p16 = scmp.ge.s32.totalorder %s15, 4
      %s22 = sphi 0, %s34
      %s23 = sphi 0, %s30
      %s24 = sphi 0, %s22
      %s25 = sphi 0, %s23
      %s26 = sphi 0, %s24
      %s27 = sphi 0, %s25
      %s39 = sphi 0, %s41
      %s42 = sphi 0, %s39
      %s43 = sphi 0, %s42
      %s59 = sphi 0, %s43
      %s63 = sphi 0, %s63
      %s65 = sphi 0, %s63
      %s66 = sphi 0, %s65
      %s80 = sphi 0, %s66
      %s84 = sphi 0, %s84
      %s86 = sphi 0, %s84
      %s87 = sphi 0, %s86
      %s101 = sphi 0, %s87
      %s109 = sphi 0, %s111
      %s112 = sphi 0, %s109
      %s113 = sphi 0, %s112
      %s129 = sphi 0, %s113
    $region4: #{tpu_custom_call.1} parent=1 // loop_header_branch
      %18 = sbr.rel (%p16) target = $region8
    $region5: #{tpu_custom_call.1} parent=1 // loop_body
      %s20 = ssub.s32 %s15, 1
      %s21 = ssub.s32 %s15, 2
      %s28 = sadd.s32 1, %s23
      %p29 = scmp.ge.s32.totalorder %s28, 1
      %s30 = scalar_select %p29, 0, %s28
      %s31 = sadd.s32 1, %s22
      %s32 = scalar_select %p29, %s31, %s22
      %p33 = scmp.ge.s32.totalorder %s32, 2
      %s34 = scalar_select %p33, 0, %s32
      %s35 = ssub.s32 %s22, %s34
      %s36 = ssub.s32 %s23, %s30
      %s37 = sor.u32 %s35, %s36
      %p38 = scmp.eq.s32.totalorder %s37, 0
      %s40 = sadd.s32 %s39, 1
      %s41 = scalar_select %p38, %s39, %s40
      %p44 = pneg %p38
      %p45 = scmp.eq.s32.totalorder %s15, 1
      %p46 = por %p44, %p45
      %p47 = scmp.ne.s32.totalorder %s39, %s42
      %p48 = scmp.eq.s32.totalorder %s15, 0
      %p49 = por %p47, %p48
      %p50 = scmp.ne.s32.totalorder %s39, %s42
      %p51 = scmp.eq.s32.totalorder %s20, 1
      %p52 = por %p50, %p51
      %p53 = scmp.ne.s32.totalorder %s42, %s43
      %p54 = scmp.eq.s32.totalorder %s20, 0
      %p55 = por %p53, %p54
      %p56 = scmp.ne.s32.totalorder %s42, %s43
      %p57 = scmp.eq.s32.totalorder %s21, 1
      %p58 = por %p56, %p57
      %p60 = scmp.ne.s32.totalorder %s43, %s59
      %p61 = scmp.eq.s32.totalorder %s21, 0
      %p62 = por %p60, %p61
      %s64 = sadd.s32 %s63, 1
      %p67 = scmp.eq.s32.totalorder %s15, 1
      %p68 = scmp.ne.s32.totalorder %s63, %s65
      %p69 = scmp.eq.s32.totalorder %s15, 0
      %p70 = por %p68, %p69
      %p71 = scmp.ne.s32.totalorder %s63, %s65
      %p72 = scmp.eq.s32.totalorder %s20, 1
      %p73 = por %p71, %p72
      %p74 = scmp.ne.s32.totalorder %s65, %s66
      %p75 = scmp.eq.s32.totalorder %s20, 0
      %p76 = por %p74, %p75
      %p77 = scmp.ne.s32.totalorder %s65, %s66
      %p78 = scmp.eq.s32.totalorder %s21, 1
      %p79 = por %p77, %p78
      %p81 = scmp.ne.s32.totalorder %s66, %s80
      %p82 = scmp.eq.s32.totalorder %s21, 0
      %p83 = por %p81, %p82
      %s85 = sadd.s32 %s84, 1
      %p88 = scmp.eq.s32.totalorder %s15, 1
      %p89 = scmp.ne.s32.totalorder %s84, %s86
      %p90 = scmp.eq.s32.totalorder %s15, 0
      %p91 = por %p89, %p90
      %p92 = scmp.ne.s32.totalorder %s84, %s86
      %p93 = scmp.eq.s32.totalorder %s20, 1
      %p94 = por %p92, %p93
      %p95 = scmp.ne.s32.totalorder %s86, %s87
      %p96 = scmp.eq.s32.totalorder %s20, 0
      %p97 = por %p95, %p96
      %p98 = scmp.ne.s32.totalorder %s86, %s87
      %p99 = scmp.eq.s32.totalorder %s21, 1
      %p100 = por %p98, %p99
      %p102 = scmp.ne.s32.totalorder %s87, %s101
      %p103 = scmp.eq.s32.totalorder %s21, 0
      %p104 = por %p102, %p103
      %s105 = ssub.s32 %s22, %s34
      %s106 = ssub.s32 %s23, %s30
      %s107 = sor.u32 %s105, %s106
      %p108 = scmp.eq.s32.totalorder %s107, 0
      %s110 = sadd.s32 %s109, 1
      %s111 = scalar_select %p108, %s109, %s110
      %p114 = pneg %p108
      %p115 = scmp.eq.s32.totalorder %s15, 1
      %p116 = por %p114, %p115
      %p117 = scmp.ne.s32.totalorder %s109, %s112
      %p118 = scmp.eq.s32.totalorder %s15, 0
      %p119 = por %p117, %p118
      %p120 = scmp.ne.s32.totalorder %s109, %s112
      %p121 = scmp.eq.s32.totalorder %s20, 1
      %p122 = por %p120, %p121
      %p123 = scmp.ne.s32.totalorder %s112, %s113
      %p124 = scmp.eq.s32.totalorder %s20, 0
      %p125 = por %p123, %p124
      %p126 = scmp.ne.s32.totalorder %s112, %s113
      %p127 = scmp.eq.s32.totalorder %s21, 1
      %p128 = por %p126, %p127
      %p130 = scmp.ne.s32.totalorder %s113, %s129
      %p131 = scmp.eq.s32.totalorder %s21, 0
      %p132 = por %p130, %p131
      %p133 = scmp.le.s32.totalorder 1, %s15
      %p134 = scmp.lt.s32.totalorder %s15, 3
      %p135 = pnand %p133, %p134
      %p136 = pneg %p135
      // Predicated region
      $region9: #{tpu_custom_call.1} parent=5 // pred_check
        _
      $region10: #{tpu_custom_call.1} parent=5 // pred_check_branch
        %138 = sbr.rel (%p135) target = $region12
      $region11: #{tpu_custom_call.1} parent=5 // pred_region
        %s139 = ssub.s32 %s15, 1
        // Predicated region
        $region13: #{tpu_custom_call.1} parent=11 // pred_check
          %p140 = pneg %p76
        $region14: #{tpu_custom_call.1} parent=11 // pred_check_branch
          %142 = sbr.rel (%p140) target = $region16
        $region15: #{tpu_custom_call.1} parent=11 // pred_region
          _
        $region16: #{tpu_custom_call.1} parent=11 // pred_fallthru
          _
        // Predicated region
        $region17: #{tpu_custom_call.1} parent=11 // pred_check
          %p143 = pneg %p97
        $region18: #{tpu_custom_call.1} parent=11 // pred_check_branch
          %145 = sbr.rel (%p143) target = $region20
        $region19: #{tpu_custom_call.1} parent=11 // pred_region
          _
        $region20: #{tpu_custom_call.1} parent=11 // pred_fallthru
          _
      $region12: #{tpu_custom_call.1} parent=5 // pred_fallthru
        _
      %p146 = scmp.lt.s32.totalorder %s15, 2
      // Predicated region
      $region21: #{tpu_custom_call.1} parent=5 // pred_check
        %p147 = pneg %p146
      $region22: #{tpu_custom_call.1} parent=5 // pred_check_branch
        %149 = sbr.rel (%p147) target = $region24
      $region23: #{tpu_custom_call.1} parent=5 // pred_region
        // Predicated region
        $region25: #{tpu_custom_call.1} parent=23 // pred_check
          %p150 = pneg %p49
        $region26: #{tpu_custom_call.1} parent=23 // pred_check_branch
          %152 = sbr.rel (%p150) target = $region28
        $region27: #{tpu_custom_call.1} parent=23 // pred_region
          %s153 = sand.u32 %s39, 1
          %s154 = scalar_lea.sflag [#allocation3], %s153
          %s155 = sand.u32 %s39, 1
          %s156 = smul.addr %s155, 512
          %s157 = scalar_lea.vmem [#allocation2], %s156
          %s158 = smul.u32 16, %s23
          %s160 = ssub.s32 8192, 8192
          %161 = vsyncadd %s154, %s160
          %s162 = smul.addr %s158, 4
          %s163 = smul.addr %s22, 64
          %s164 = sadd.s32 %s162, %s163
          %s165 = smul.addr %s164, 128
          %s166 = scalar_lea.hbm %s0, %s165
          %s167 = sshll.u32 %s157, 4
          %s168 = int_to_ptr.vmem [resolvable:$true] %s167
          %173 = dma.hbm_to_vmem [thread:$0]  %s166, 8192, %s168, %s154, 128, 128, 8
        $region28: #{tpu_custom_call.1} parent=23 // pred_fallthru
          _
      $region24: #{tpu_custom_call.1} parent=5 // pred_fallthru
        _
      %p174 = scmp.le.s32.totalorder 1, %s15
      %p175 = scmp.lt.s32.totalorder %s15, 3
      %p176 = pnand %p174, %p175
      %p177 = pneg %p176
      // Predicated region
      $region29: #{tpu_custom_call.1} parent=5 // pred_check
        _
      $region30: #{tpu_custom_call.1} parent=5 // pred_check_branch
        %179 = sbr.rel (%p176) target = $region32
      $region31: #{tpu_custom_call.1} parent=5 // pred_region
        %s180 = ssub.s32 %s15, 1
        %s181 = sand.u32 %s42, 1
        %s182 = scalar_lea.sflag [#allocation3], %s181
        %s183 = sand.u32 %s42, 1
        %s184 = smul.addr %s183, 512
        %s185 = scalar_lea.vmem [#allocation2], %s184
        // Predicated region
        $region33: #{tpu_custom_call.1} parent=31 // pred_check
          %p186 = pneg %p55
        $region34: #{tpu_custom_call.1} parent=31 // pred_check_branch
          %188 = sbr.rel (%p186) target = $region36
        $region35: #{tpu_custom_call.1} parent=31 // pred_region
          %189 = dma.done %s182, 8192
        $region36: #{tpu_custom_call.1} parent=31 // pred_fallthru
          _
        %s190 = sand.u32 %s42, 1
        %s191 = scalar_lea.sflag [#allocation3], %s190
        %s192 = sand.u32 %s42, 1
        %s193 = smul.addr %s192, 512
        %s194 = scalar_lea.vmem [#allocation2], %s193
        %p195 = pneg %p55
        %p196 = pneg %p52
        %p197 = pneg %p76
        %p198 = pneg %p73
        %p199 = pneg %p97
        %p200 = pneg %p94
        %p201 = pneg %p125
        %p202 = pneg %p122
        %s203 = sand.u32 %s112, 1
        %s204 = scalar_lea.sflag [#allocation4], %s203
        %s205 = sand.u32 %s112, 1
        %s206 = smul.addr %s205, 1024
        %s207 = scalar_lea.vmem [#allocation5], %s206
        %s208 = smul.u32 16, %s25
        %s209 = smul.u32 16, %s25
        %v210 = vld [vmem:[%s1] sm:$0xff]
        %v211 = vld [vmem:[%s1 + $0x8] sm:$0xff]
        %v212 = vld [vmem:[%s1 + $0x10] sm:$0xff]
        %v213 = vld [vmem:[%s1 + $0x18] sm:$0xff]
        %v214 = vld [vmem:[%s1 + $0x20] sm:$0xff]
        %v215 = vld [vmem:[%s1 + $0x28] sm:$0xff]
        %v216 = vld [vmem:[%s1 + $0x30] sm:$0xff]
        %v217 = vld [vmem:[%s1 + $0x38] sm:$0xff]
        %v218 = vld [vmem:[%s2] sm:$0xff]
        %v219 = vld [vmem:[%s2 + $0x8] sm:$0xff]
        %v220 = vld [vmem:[%s2 + $0x10] sm:$0xff]
        %v221 = vld [vmem:[%s2 + $0x18] sm:$0xff]
        %v222 = vld [vmem:[%s2 + $0x20] sm:$0xff]
        %v223 = vld [vmem:[%s2 + $0x28] sm:$0xff]
        %v224 = vld [vmem:[%s2 + $0x30] sm:$0xff]
        %v225 = vld [vmem:[%s2 + $0x38] sm:$0xff]
        %v226 = vld [vmem:[%s185] sm:$0xff]
        %v227 = vld [vmem:[%s185 + $0x8] sm:$0xff]
        %v228 = vld [vmem:[%s185 + $0x10] sm:$0xff]
        %v229 = vld [vmem:[%s185 + $0x18] sm:$0xff]
        %231 = vset.pattern.permute.xlu0 0
        %232 = vperm.xlu0 %231, %v218
        %v233 = vpop.permute.xlu0 %232
        %236 = vset.pattern.permute.xlu0 0
        %237 = vperm.xlu0 %236, %v219
        %v238 = vpop.permute.xlu0 %237
        %241 = vset.pattern.permute.xlu0 0
        %242 = vperm.xlu0 %241, %v220
        %v243 = vpop.permute.xlu0 %242
        %246 = vset.pattern.permute.xlu0 0
        %247 = vperm.xlu0 %246, %v221
        %v248 = vpop.permute.xlu0 %247
        %251 = vset.pattern.permute.xlu0 0
        %252 = vperm.xlu0 %251, %v222
        %v253 = vpop.permute.xlu0 %252
        %256 = vset.pattern.permute.xlu0 0
        %257 = vperm.xlu0 %256, %v223
        %v258 = vpop.permute.xlu0 %257
        %261 = vset.pattern.permute.xlu0 0
        %262 = vperm.xlu0 %261, %v224
        %v263 = vpop.permute.xlu0 %262
        %266 = vset.pattern.permute.xlu0 0
        %267 = vperm.xlu0 %266, %v225
        %v268 = vpop.permute.xlu0 %267
        %vm270 = vcmask 261120
        %v272 = vsel %vm270, %v210, 0
        %v275 = vsel %vm270, %v211, 0
        %v278 = vsel %vm270, %v212, 0
        %v281 = vsel %vm270, %v213, 0
        %v284 = vsel %vm270, %v214, 0
        %v287 = vsel %vm270, %v215, 0
        %v290 = vsel %vm270, %v216, 0
        %v293 = vsel %vm270, %v217, 0
        %295 = vmatprep.subr.mxu0 0.0
        %296 = vmatpush1.msra.mxu0 0.0
        %297 = vmatprep.subr.mxu0 0.0
        %298 = vmatpush1.msra.mxu0 0.0
        %299 = vmatprep.subr.mxu0 0.0
        %300 = vmatpush1.msra.mxu0 0.0
        %301 = vmatprep.subr.mxu0 0.0
        %302 = vmatpush1.msra.mxu0 0.0
        %303 = vmatprep.subr.mxu0 0.0
        %304 = vmatpush1.msra.mxu0 0.0
        %305 = vmatprep.subr.mxu0 0.0
        %306 = vmatpush1.msra.mxu0 0.0
        %307 = vmatprep.subr.mxu0 0.0
        %308 = vmatpush1.msra.mxu0 0.0
        %309 = vmatprep.subr.mxu0 0.0
        %310 = vmatpush1.msra.mxu0 0.0
        %311 = vmatprep.subr.mxu0 0.0
        %312 = vmatpush1.msra.mxu0 0.0
        %313 = vmatprep.subr.mxu0 0.0
        %314 = vmatpush1.msra.mxu0 0.0
        %315 = vmatprep.subr.mxu0 0.0
        %316 = vmatpush1.msra.mxu0 0.0
        %317 = vmatprep.subr.mxu0 0.0
        %318 = vmatpush1.msra.mxu0 0.0
        %319 = vmatprep.subr.mxu0 0.0
        %320 = vmatpush1.msra.mxu0 %v229
        %321 = vmatprep.subr.mxu0 0.0
        %322 = vmatpush1.msra.mxu0 %v228
        %323 = vmatprep.subr.mxu0 0.0
        %324 = vmatpush1.msra.mxu0 %v227
        %325 = vmatprep.subr.mxu0 0.0
        %326 = vmatpush1.msra.mxu0 %v226
        %327 = vmatprep.subr.mxu0 0.0
        %328 = vmatpush2.msra.mxu0 0.0
        %329 = vmatprep.subr.mxu0 0.0
        %330 = vmatpush2.msra.mxu0 0.0
        %331 = vmatprep.subr.mxu0 0.0
        %332 = vmatpush2.msra.mxu0 0.0
        %333 = vmatprep.subr.mxu0 0.0
        %334 = vmatpush2.msra.mxu0 0.0
        %335 = vmatprep.subr.mxu0 0.0
        %336 = vmatpush2.msra.mxu0 0.0
        %337 = vmatprep.subr.mxu0 0.0
        %338 = vmatpush2.msra.mxu0 0.0
        %339 = vmatprep.subr.mxu0 0.0
        %340 = vmatpush2.msra.mxu0 0.0
        %341 = vmatprep.subr.mxu0 0.0
        %342 = vmatpush2.msra.mxu0 0.0
        %343 = vmatprep.subr.mxu0 0.0
        %344 = vmatpush2.msra.mxu0 0.0
        %345 = vmatprep.subr.mxu0 0.0
        %346 = vmatpush2.msra.mxu0 0.0
        %347 = vmatprep.subr.mxu0 0.0
        %348 = vmatpush2.msra.mxu0 0.0
        %349 = vmatprep.subr.mxu0 0.0
        %350 = vmatpush2.msra.mxu0 0.0
        %351 = vmatprep.subr.mxu0 0.0
        %352 = vmatpush2.msra.mxu0 0.0
        %353 = vmatprep.subr.mxu0 0.0
        %354 = vmatpush2.msra.mxu0 0.0
        %355 = vmatprep.subr.mxu0 0.0
        %356 = vmatpush2.msra.mxu0 0.0
        %357 = vmatprep.subr.mxu0 0.0
        %358 = vmatpush2.msra.mxu0 0.0
        %359 = vmatprep.mubr.f32.mxu0 0.0
        %360 = vmatmul.mubr.f32.gmra.mxu0 %v272
        %v361 = vpop.f32.mrf.mxu0
        %v362 = vadd.f32 %v233, %v361
        %v363 = vpop.f32.mrf.mxu0
        %364 = vmatprep.mubr.f32.mxu0 0.0
        %365 = vmatmul.mubr.f32.gmra.mxu0 %v275
        %v366 = vpop.f32.mrf.mxu0
        %v367 = vadd.f32 %v238, %v366
        %v368 = vpop.f32.mrf.mxu0
        %369 = vmatprep.mubr.f32.mxu0 0.0
        %370 = vmatmul.mubr.f32.gmra.mxu0 %v278
        %v371 = vpop.f32.mrf.mxu0
        %v372 = vadd.f32 %v243, %v371
        %v373 = vpop.f32.mrf.mxu0
        %374 = vmatprep.mubr.f32.mxu0 0.0
        %375 = vmatmul.mubr.f32.gmra.mxu0 %v281
        %v376 = vpop.f32.mrf.mxu0
        %v377 = vadd.f32 %v248, %v376
        %v378 = vpop.f32.mrf.mxu0
        %379 = vmatprep.mubr.f32.mxu0 0.0
        %380 = vmatmul.mubr.f32.gmra.mxu0 %v284
        %v381 = vpop.f32.mrf.mxu0
        %v382 = vadd.f32 %v253, %v381
        %v383 = vpop.f32.mrf.mxu0
        %384 = vmatprep.mubr.f32.mxu0 0.0
        %385 = vmatmul.mubr.f32.gmra.mxu0 %v287
        %v386 = vpop.f32.mrf.mxu0
        %v387 = vadd.f32 %v258, %v386
        %v388 = vpop.f32.mrf.mxu0
        %389 = vmatprep.mubr.f32.mxu0 0.0
        %390 = vmatmul.mubr.f32.gmra.mxu0 %v290
        %v391 = vpop.f32.mrf.mxu0
        %v392 = vadd.f32 %v263, %v391
        %v393 = vpop.f32.mrf.mxu0
        %394 = vmatprep.mubr.f32.mxu0 0.0
        %395 = vmatmul.mubr.f32.gmra.mxu0 %v293
        %v396 = vpop.f32.mrf.mxu0
        %v397 = vadd.f32 %v268, %v396
        %v398 = vpop.f32.mrf.mxu0
        %399 = vdwg.mxu0
        %400 = vst [vmem:[%s207] sm:$0xff] %v362
        %401 = vst [vmem:[%s207 + $0x80] sm:$0xff] %v367
        %402 = vst [vmem:[%s207 + $0x100] sm:$0xff] %v372
        %403 = vst [vmem:[%s207 + $0x180] sm:$0xff] %v377
        %404 = vst [vmem:[%s207 + $0x200] sm:$0xff] %v382
        %405 = vst [vmem:[%s207 + $0x280] sm:$0xff] %v387
        %406 = vst [vmem:[%s207 + $0x300] sm:$0xff] %v392
        %407 = vst [vmem:[%s207 + $0x380] sm:$0xff] %v397
        %s408 = scalar_lea.vmem %s185, 32 [#allocation2]
        %v409 = vld [vmem:[%s408] sm:$0xff]
        %v410 = vld [vmem:[%s408 + $0x8] sm:$0xff]
        %v411 = vld [vmem:[%s408 + $0x10] sm:$0xff]
        %v412 = vld [vmem:[%s408 + $0x18] sm:$0xff]
        %413 = vmatprep.subr.mxu0 0.0
        %414 = vmatpush1.msra.mxu0 0.0
        %415 = vmatprep.subr.mxu0 0.0
        %416 = vmatpush1.msra.mxu0 0.0
        %417 = vmatprep.subr.mxu0 0.0
        %418 = vmatpush1.msra.mxu0 0.0
        %419 = vmatprep.subr.mxu0 0.0
        %420 = vmatpush1.msra.mxu0 0.0
        %421 = vmatprep.subr.mxu0 0.0
        %422 = vmatpush1.msra.mxu0 0.0
        %423 = vmatprep.subr.mxu0 0.0
        %424 = vmatpush1.msra.mxu0 0.0
        %425 = vmatprep.subr.mxu0 0.0
        %426 = vmatpush1.msra.mxu0 0.0
        %427 = vmatprep.subr.mxu0 0.0
        %428 = vmatpush1.msra.mxu0 0.0
        %429 = vmatprep.subr.mxu0 0.0
        %430 = vmatpush1.msra.mxu0 0.0
        %431 = vmatprep.subr.mxu0 0.0
        %432 = vmatpush1.msra.mxu0 0.0
        %433 = vmatprep.subr.mxu0 0.0
        %434 = vmatpush1.msra.mxu0 0.0
        %435 = vmatprep.subr.mxu0 0.0
        %436 = vmatpush1.msra.mxu0 0.0
        %437 = vmatprep.subr.mxu0 0.0
        %438 = vmatpush1.msra.mxu0 %v412
        %439 = vmatprep.subr.mxu0 0.0
        %440 = vmatpush1.msra.mxu0 %v411
        %441 = vmatprep.subr.mxu0 0.0
        %442 = vmatpush1.msra.mxu0 %v410
        %443 = vmatprep.subr.mxu0 0.0
        %444 = vmatpush1.msra.mxu0 %v409
        %445 = vmatprep.subr.mxu0 0.0
        %446 = vmatpush2.msra.mxu0 0.0
        %447 = vmatprep.subr.mxu0 0.0
        %448 = vmatpush2.msra.mxu0 0.0
        %449 = vmatprep.subr.mxu0 0.0
        %450 = vmatpush2.msra.mxu0 0.0
        %451 = vmatprep.subr.mxu0 0.0
        %452 = vmatpush2.msra.mxu0 0.0
        %453 = vmatprep.subr.mxu0 0.0
        %454 = vmatpush2.msra.mxu0 0.0
        %455 = vmatprep.subr.mxu0 0.0
        %456 = vmatpush2.msra.mxu0 0.0
        %457 = vmatprep.subr.mxu0 0.0
        %458 = vmatpush2.msra.mxu0 0.0
        %459 = vmatprep.subr.mxu0 0.0
        %460 = vmatpush2.msra.mxu0 0.0
        %461 = vmatprep.subr.mxu0 0.0
        %462 = vmatpush2.msra.mxu0 0.0
        %463 = vmatprep.subr.mxu0 0.0
        %464 = vmatpush2.msra.mxu0 0.0
        %465 = vmatprep.subr.mxu0 0.0
        %466 = vmatpush2.msra.mxu0 0.0
        %467 = vmatprep.subr.mxu0 0.0
        %468 = vmatpush2.msra.mxu0 0.0
        %469 = vmatprep.subr.mxu0 0.0
        %470 = vmatpush2.msra.mxu0 0.0
        %471 = vmatprep.subr.mxu0 0.0
        %472 = vmatpush2.msra.mxu0 0.0
        %473 = vmatprep.subr.mxu0 0.0
        %474 = vmatpush2.msra.mxu0 0.0
        %475 = vmatprep.subr.mxu0 0.0
        %476 = vmatpush2.msra.mxu0 0.0
        %477 = vmatprep.mubr.f32.mxu0 0.0
        %478 = vmatmul.mubr.f32.gmra.mxu0 %v272
        %v479 = vpop.f32.mrf.mxu0
        %v480 = vadd.f32 %v233, %v479
        %v481 = vpop.f32.mrf.mxu0
        %482 = vmatprep.mubr.f32.mxu0 0.0
        %483 = vmatmul.mubr.f32.gmra.mxu0 %v275
        %v484 = vpop.f32.mrf.mxu0
        %v485 = vadd.f32 %v238, %v484
        %v486 = vpop.f32.mrf.mxu0
        %487 = vmatprep.mubr.f32.mxu0 0.0
        %488 = vmatmul.mubr.f32.gmra.mxu0 %v278
        %v489 = vpop.f32.mrf.mxu0
        %v490 = vadd.f32 %v243, %v489
        %v491 = vpop.f32.mrf.mxu0
        %492 = vmatprep.mubr.f32.mxu0 0.0
        %493 = vmatmul.mubr.f32.gmra.mxu0 %v281
        %v494 = vpop.f32.mrf.mxu0
        %v495 = vadd.f32 %v248, %v494
        %v496 = vpop.f32.mrf.mxu0
        %497 = vmatprep.mubr.f32.mxu0 0.0
        %498 = vmatmul.mubr.f32.gmra.mxu0 %v284
        %v499 = vpop.f32.mrf.mxu0
        %v500 = vadd.f32 %v253, %v499
        %v501 = vpop.f32.mrf.mxu0
        %502 = vmatprep.mubr.f32.mxu0 0.0
        %503 = vmatmul.mubr.f32.gmra.mxu0 %v287
        %v504 = vpop.f32.mrf.mxu0
        %v505 = vadd.f32 %v258, %v504
        %v506 = vpop.f32.mrf.mxu0
        %507 = vmatprep.mubr.f32.mxu0 0.0
        %508 = vmatmul.mubr.f32.gmra.mxu0 %v290
        %v509 = vpop.f32.mrf.mxu0
        %v510 = vadd.f32 %v263, %v509
        %v511 = vpop.f32.mrf.mxu0
        %512 = vmatprep.mubr.f32.mxu0 0.0
        %513 = vmatmul.mubr.f32.gmra.mxu0 %v293
        %v514 = vpop.f32.mrf.mxu0
        %v515 = vadd.f32 %v268, %v514
        %v516 = vpop.f32.mrf.mxu0
        %517 = vdwg.mxu0
        %518 = vst [vmem:[%s207 + $0x8] sm:$0xff] %v480
        %519 = vst [vmem:[%s207 + $0x88] sm:$0xff] %v485
        %520 = vst [vmem:[%s207 + $0x108] sm:$0xff] %v490
        %521 = vst [vmem:[%s207 + $0x188] sm:$0xff] %v495
        %522 = vst [vmem:[%s207 + $0x208] sm:$0xff] %v500
        %523 = vst [vmem:[%s207 + $0x288] sm:$0xff] %v505
        %524 = vst [vmem:[%s207 + $0x308] sm:$0xff] %v510
        %525 = vst [vmem:[%s207 + $0x388] sm:$0xff] %v515
        %s526 = scalar_lea.vmem %s185, 64 [#allocation2]
        %v527 = vld [vmem:[%s526] sm:$0xff]
        %v528 = vld [vmem:[%s526 + $0x8] sm:$0xff]
        %v529 = vld [vmem:[%s526 + $0x10] sm:$0xff]
        %v530 = vld [vmem:[%s526 + $0x18] sm:$0xff]
        %531 = vmatprep.subr.mxu0 0.0
        %532 = vmatpush1.msra.mxu0 0.0
        %533 = vmatprep.subr.mxu0 0.0
        %534 = vmatpush1.msra.mxu0 0.0
        %535 = vmatprep.subr.mxu0 0.0
        %536 = vmatpush1.msra.mxu0 0.0
        %537 = vmatprep.subr.mxu0 0.0
        %538 = vmatpush1.msra.mxu0 0.0
        %539 = vmatprep.subr.mxu0 0.0
        %540 = vmatpush1.msra.mxu0 0.0
        %541 = vmatprep.subr.mxu0 0.0
        %542 = vmatpush1.msra.mxu0 0.0
        %543 = vmatprep.subr.mxu0 0.0
        %544 = vmatpush1.msra.mxu0 0.0
        %545 = vmatprep.subr.mxu0 0.0
        %546 = vmatpush1.msra.mxu0 0.0
        %547 = vmatprep.subr.mxu0 0.0
        %548 = vmatpush1.msra.mxu0 0.0
        %549 = vmatprep.subr.mxu0 0.0
        %550 = vmatpush1.msra.mxu0 0.0
        %551 = vmatprep.subr.mxu0 0.0
        %552 = vmatpush1.msra.mxu0 0.0
        %553 = vmatprep.subr.mxu0 0.0
        %554 = vmatpush1.msra.mxu0 0.0
        %555 = vmatprep.subr.mxu0 0.0
        %556 = vmatpush1.msra.mxu0 %v530
        %557 = vmatprep.subr.mxu0 0.0
        %558 = vmatpush1.msra.mxu0 %v529
        %559 = vmatprep.subr.mxu0 0.0
        %560 = vmatpush1.msra.mxu0 %v528
        %561 = vmatprep.subr.mxu0 0.0
        %562 = vmatpush1.msra.mxu0 %v527
        %563 = vmatprep.subr.mxu0 0.0
        %564 = vmatpush2.msra.mxu0 0.0
        %565 = vmatprep.subr.mxu0 0.0
        %566 = vmatpush2.msra.mxu0 0.0
        %567 = vmatprep.subr.mxu0 0.0
        %568 = vmatpush2.msra.mxu0 0.0
        %569 = vmatprep.subr.mxu0 0.0
        %570 = vmatpush2.msra.mxu0 0.0
        %571 = vmatprep.subr.mxu0 0.0
        %572 = vmatpush2.msra.mxu0 0.0
        %573 = vmatprep.subr.mxu0 0.0
        %574 = vmatpush2.msra.mxu0 0.0
        %575 = vmatprep.subr.mxu0 0.0
        %576 = vmatpush2.msra.mxu0 0.0
        %577 = vmatprep.subr.mxu0 0.0
        %578 = vmatpush2.msra.mxu0 0.0
        %579 = vmatprep.subr.mxu0 0.0
        %580 = vmatpush2.msra.mxu0 0.0
        %581 = vmatprep.subr.mxu0 0.0
        %582 = vmatpush2.msra.mxu0 0.0
        %583 = vmatprep.subr.mxu0 0.0
        %584 = vmatpush2.msra.mxu0 0.0
        %585 = vmatprep.subr.mxu0 0.0
        %586 = vmatpush2.msra.mxu0 0.0
        %587 = vmatprep.subr.mxu0 0.0
        %588 = vmatpush2.msra.mxu0 0.0
        %589 = vmatprep.subr.mxu0 0.0
        %590 = vmatpush2.msra.mxu0 0.0
        %591 = vmatprep.subr.mxu0 0.0
        %592 = vmatpush2.msra.mxu0 0.0
        %593 = vmatprep.subr.mxu0 0.0
        %594 = vmatpush2.msra.mxu0 0.0
        %595 = vmatprep.mubr.f32.mxu0 0.0
        %596 = vmatmul.mubr.f32.gmra.mxu0 %v272
        %v597 = vpop.f32.mrf.mxu0
        %v598 = vadd.f32 %v233, %v597
        %v599 = vpop.f32.mrf.mxu0
        %600 = vmatprep.mubr.f32.mxu0 0.0
        %601 = vmatmul.mubr.f32.gmra.mxu0 %v275
        %v602 = vpop.f32.mrf.mxu0
        %v603 = vadd.f32 %v238, %v602
        %v604 = vpop.f32.mrf.mxu0
        %605 = vmatprep.mubr.f32.mxu0 0.0
        %606 = vmatmul.mubr.f32.gmra.mxu0 %v278
        %v607 = vpop.f32.mrf.mxu0
        %v608 = vadd.f32 %v243, %v607
        %v609 = vpop.f32.mrf.mxu0
        %610 = vmatprep.mubr.f32.mxu0 0.0
        %611 = vmatmul.mubr.f32.gmra.mxu0 %v281
        %v612 = vpop.f32.mrf.mxu0
        %v613 = vadd.f32 %v248, %v612
        %v614 = vpop.f32.mrf.mxu0
        %615 = vmatprep.mubr.f32.mxu0 0.0
        %616 = vmatmul.mubr.f32.gmra.mxu0 %v284
        %v617 = vpop.f32.mrf.mxu0
        %v618 = vadd.f32 %v253, %v617
        %v619 = vpop.f32.mrf.mxu0
        %620 = vmatprep.mubr.f32.mxu0 0.0
        %621 = vmatmul.mubr.f32.gmra.mxu0 %v287
        %v622 = vpop.f32.mrf.mxu0
        %v623 = vadd.f32 %v258, %v622
        %v624 = vpop.f32.mrf.mxu0
        %625 = vmatprep.mubr.f32.mxu0 0.0
        %626 = vmatmul.mubr.f32.gmra.mxu0 %v290
        %v627 = vpop.f32.mrf.mxu0
        %v628 = vadd.f32 %v263, %v627
        %v629 = vpop.f32.mrf.mxu0
        %630 = vmatprep.mubr.f32.mxu0 0.0
        %631 = vmatmul.mubr.f32.gmra.mxu0 %v293
        %v632 = vpop.f32.mrf.mxu0
        %v633 = vadd.f32 %v268, %v632
        %v634 = vpop.f32.mrf.mxu0
        %635 = vdwg.mxu0
        %636 = vst [vmem:[%s207 + $0x10] sm:$0xff] %v598
        %637 = vst [vmem:[%s207 + $0x90] sm:$0xff] %v603
        %638 = vst [vmem:[%s207 + $0x110] sm:$0xff] %v608
        %639 = vst [vmem:[%s207 + $0x190] sm:$0xff] %v613
        %640 = vst [vmem:[%s207 + $0x210] sm:$0xff] %v618
        %641 = vst [vmem:[%s207 + $0x290] sm:$0xff] %v623
        %642 = vst [vmem:[%s207 + $0x310] sm:$0xff] %v628
        %643 = vst [vmem:[%s207 + $0x390] sm:$0xff] %v633
        %s644 = scalar_lea.vmem %s185, 96 [#allocation2]
        %v645 = vld [vmem:[%s644] sm:$0xff]
        %v646 = vld [vmem:[%s644 + $0x8] sm:$0xff]
        %v647 = vld [vmem:[%s644 + $0x10] sm:$0xff]
        %v648 = vld [vmem:[%s644 + $0x18] sm:$0xff]
        %649 = vmatprep.subr.mxu0 0.0
        %650 = vmatpush1.msra.mxu0 0.0
        %651 = vmatprep.subr.mxu0 0.0
        %652 = vmatpush1.msra.mxu0 0.0
        %653 = vmatprep.subr.mxu0 0.0
        %654 = vmatpush1.msra.mxu0 0.0
        %655 = vmatprep.subr.mxu0 0.0
        %656 = vmatpush1.msra.mxu0 0.0
        %657 = vmatprep.subr.mxu0 0.0
        %658 = vmatpush1.msra.mxu0 0.0
        %659 = vmatprep.subr.mxu0 0.0
        %660 = vmatpush1.msra.mxu0 0.0
        %661 = vmatprep.subr.mxu0 0.0
        %662 = vmatpush1.msra.mxu0 0.0
        %663 = vmatprep.subr.mxu0 0.0
        %664 = vmatpush1.msra.mxu0 0.0
        %665 = vmatprep.subr.mxu0 0.0
        %666 = vmatpush1.msra.mxu0 0.0
        %667 = vmatprep.subr.mxu0 0.0
        %668 = vmatpush1.msra.mxu0 0.0
        %669 = vmatprep.subr.mxu0 0.0
        %670 = vmatpush1.msra.mxu0 0.0
        %671 = vmatprep.subr.mxu0 0.0
        %672 = vmatpush1.msra.mxu0 0.0
        %673 = vmatprep.subr.mxu0 0.0
        %674 = vmatpush1.msra.mxu0 %v648
        %675 = vmatprep.subr.mxu0 0.0
        %676 = vmatpush1.msra.mxu0 %v647
        %677 = vmatprep.subr.mxu0 0.0
        %678 = vmatpush1.msra.mxu0 %v646
        %679 = vmatprep.subr.mxu0 0.0
        %680 = vmatpush1.msra.mxu0 %v645
        %681 = vmatprep.subr.mxu0 0.0
        %682 = vmatpush2.msra.mxu0 0.0
        %683 = vmatprep.subr.mxu0 0.0
        %684 = vmatpush2.msra.mxu0 0.0
        %685 = vmatprep.subr.mxu0 0.0
        %686 = vmatpush2.msra.mxu0 0.0
        %687 = vmatprep.subr.mxu0 0.0
        %688 = vmatpush2.msra.mxu0 0.0
        %689 = vmatprep.subr.mxu0 0.0
        %690 = vmatpush2.msra.mxu0 0.0
        %691 = vmatprep.subr.mxu0 0.0
        %692 = vmatpush2.msra.mxu0 0.0
        %693 = vmatprep.subr.mxu0 0.0
        %694 = vmatpush2.msra.mxu0 0.0
        %695 = vmatprep.subr.mxu0 0.0
        %696 = vmatpush2.msra.mxu0 0.0
        %697 = vmatprep.subr.mxu0 0.0
        %698 = vmatpush2.msra.mxu0 0.0
        %699 = vmatprep.subr.mxu0 0.0
        %700 = vmatpush2.msra.mxu0 0.0
        %701 = vmatprep.subr.mxu0 0.0
        %702 = vmatpush2.msra.mxu0 0.0
        %703 = vmatprep.subr.mxu0 0.0
        %704 = vmatpush2.msra.mxu0 0.0
        %705 = vmatprep.subr.mxu0 0.0
        %706 = vmatpush2.msra.mxu0 0.0
        %707 = vmatprep.subr.mxu0 0.0
        %708 = vmatpush2.msra.mxu0 0.0
        %709 = vmatprep.subr.mxu0 0.0
        %710 = vmatpush2.msra.mxu0 0.0
        %711 = vmatprep.subr.mxu0 0.0
        %712 = vmatpush2.msra.mxu0 0.0
        %713 = vmatprep.mubr.f32.mxu0 0.0
        %714 = vmatmul.mubr.f32.gmra.mxu0 %v272
        %v715 = vpop.f32.mrf.mxu0
        %v716 = vadd.f32 %v233, %v715
        %v717 = vpop.f32.mrf.mxu0
        %718 = vmatprep.mubr.f32.mxu0 0.0
        %719 = vmatmul.mubr.f32.gmra.mxu0 %v275
        %v720 = vpop.f32.mrf.mxu0
        %v721 = vadd.f32 %v238, %v720
        %v722 = vpop.f32.mrf.mxu0
        %723 = vmatprep.mubr.f32.mxu0 0.0
        %724 = vmatmul.mubr.f32.gmra.mxu0 %v278
        %v725 = vpop.f32.mrf.mxu0
        %v726 = vadd.f32 %v243, %v725
        %v727 = vpop.f32.mrf.mxu0
        %728 = vmatprep.mubr.f32.mxu0 0.0
        %729 = vmatmul.mubr.f32.gmra.mxu0 %v281
        %v730 = vpop.f32.mrf.mxu0
        %v731 = vadd.f32 %v248, %v730
        %v732 = vpop.f32.mrf.mxu0
        %733 = vmatprep.mubr.f32.mxu0 0.0
        %734 = vmatmul.mubr.f32.gmra.mxu0 %v284
        %v735 = vpop.f32.mrf.mxu0
        %v736 = vadd.f32 %v253, %v735
        %v737 = vpop.f32.mrf.mxu0
        %738 = vmatprep.mubr.f32.mxu0 0.0
        %739 = vmatmul.mubr.f32.gmra.mxu0 %v287
        %v740 = vpop.f32.mrf.mxu0
        %v741 = vadd.f32 %v258, %v740
        %v742 = vpop.f32.mrf.mxu0
        %743 = vmatprep.mubr.f32.mxu0 0.0
        %744 = vmatmul.mubr.f32.gmra.mxu0 %v290
        %v745 = vpop.f32.mrf.mxu0
        %v746 = vadd.f32 %v263, %v745
        %v747 = vpop.f32.mrf.mxu0
        %748 = vmatprep.mubr.f32.mxu0 0.0
        %749 = vmatmul.mubr.f32.gmra.mxu0 %v293
        %v750 = vpop.f32.mrf.mxu0
        %v751 = vadd.f32 %v268, %v750
        %v752 = vpop.f32.mrf.mxu0
        %753 = vdwg.mxu0
        %754 = vst [vmem:[%s207 + $0x18] sm:$0xff] %v716
        %755 = vst [vmem:[%s207 + $0x98] sm:$0xff] %v721
        %756 = vst [vmem:[%s207 + $0x118] sm:$0xff] %v726
        %757 = vst [vmem:[%s207 + $0x198] sm:$0xff] %v731
        %758 = vst [vmem:[%s207 + $0x218] sm:$0xff] %v736
        %759 = vst [vmem:[%s207 + $0x298] sm:$0xff] %v741
        %760 = vst [vmem:[%s207 + $0x318] sm:$0xff] %v746
        %761 = vst [vmem:[%s207 + $0x398] sm:$0xff] %v751
        %s762 = scalar_lea.vmem %s185, 128 [#allocation2]
        %v763 = vld [vmem:[%s762] sm:$0xff]
        %v764 = vld [vmem:[%s762 + $0x8] sm:$0xff]
        %v765 = vld [vmem:[%s762 + $0x10] sm:$0xff]
        %v766 = vld [vmem:[%s762 + $0x18] sm:$0xff]
        %767 = vmatprep.subr.mxu0 0.0
        %768 = vmatpush1.msra.mxu0 0.0
        %769 = vmatprep.subr.mxu0 0.0
        %770 = vmatpush1.msra.mxu0 0.0
        %771 = vmatprep.subr.mxu0 0.0
        %772 = vmatpush1.msra.mxu0 0.0
        %773 = vmatprep.subr.mxu0 0.0
        %774 = vmatpush1.msra.mxu0 0.0
        %775 = vmatprep.subr.mxu0 0.0
        %776 = vmatpush1.msra.mxu0 0.0
        %777 = vmatprep.subr.mxu0 0.0
        %778 = vmatpush1.msra.mxu0 0.0
        %779 = vmatprep.subr.mxu0 0.0
        %780 = vmatpush1.msra.mxu0 0.0
        %781 = vmatprep.subr.mxu0 0.0
        %782 = vmatpush1.msra.mxu0 0.0
        %783 = vmatprep.subr.mxu0 0.0
        %784 = vmatpush1.msra.mxu0 0.0
        %785 = vmatprep.subr.mxu0 0.0
        %786 = vmatpush1.msra.mxu0 0.0
        %787 = vmatprep.subr.mxu0 0.0
        %788 = vmatpush1.msra.mxu0 0.0
        %789 = vmatprep.subr.mxu0 0.0
        %790 = vmatpush1.msra.mxu0 0.0
        %791 = vmatprep.subr.mxu0 0.0
        %792 = vmatpush1.msra.mxu0 %v766
        %793 = vmatprep.subr.mxu0 0.0
        %794 = vmatpush1.msra.mxu0 %v765
        %795 = vmatprep.subr.mxu0 0.0
        %796 = vmatpush1.msra.mxu0 %v764
        %797 = vmatprep.subr.mxu0 0.0
        %798 = vmatpush1.msra.mxu0 %v763
        %799 = vmatprep.subr.mxu0 0.0
        %800 = vmatpush2.msra.mxu0 0.0
        %801 = vmatprep.subr.mxu0 0.0
        %802 = vmatpush2.msra.mxu0 0.0
        %803 = vmatprep.subr.mxu0 0.0
        %804 = vmatpush2.msra.mxu0 0.0
        %805 = vmatprep.subr.mxu0 0.0
        %806 = vmatpush2.msra.mxu0 0.0
        %807 = vmatprep.subr.mxu0 0.0
        %808 = vmatpush2.msra.mxu0 0.0
        %809 = vmatprep.subr.mxu0 0.0
        %810 = vmatpush2.msra.mxu0 0.0
        %811 = vmatprep.subr.mxu0 0.0
        %812 = vmatpush2.msra.mxu0 0.0
        %813 = vmatprep.subr.mxu0 0.0
        %814 = vmatpush2.msra.mxu0 0.0
        %815 = vmatprep.subr.mxu0 0.0
        %816 = vmatpush2.msra.mxu0 0.0
        %817 = vmatprep.subr.mxu0 0.0
        %818 = vmatpush2.msra.mxu0 0.0
        %819 = vmatprep.subr.mxu0 0.0
        %820 = vmatpush2.msra.mxu0 0.0
        %821 = vmatprep.subr.mxu0 0.0
        %822 = vmatpush2.msra.mxu0 0.0
        %823 = vmatprep.subr.mxu0 0.0
        %824 = vmatpush2.msra.mxu0 0.0
        %825 = vmatprep.subr.mxu0 0.0
        %826 = vmatpush2.msra.mxu0 0.0
        %827 = vmatprep.subr.mxu0 0.0
        %828 = vmatpush2.msra.mxu0 0.0
        %829 = vmatprep.subr.mxu0 0.0
        %830 = vmatpush2.msra.mxu0 0.0
        %831 = vmatprep.mubr.f32.mxu0 0.0
        %832 = vmatmul.mubr.f32.gmra.mxu0 %v272
        %v833 = vpop.f32.mrf.mxu0
        %v834 = vadd.f32 %v233, %v833
        %v835 = vpop.f32.mrf.mxu0
        %836 = vmatprep.mubr.f32.mxu0 0.0
        %837 = vmatmul.mubr.f32.gmra.mxu0 %v275
        %v838 = vpop.f32.mrf.mxu0
        %v839 = vadd.f32 %v238, %v838
        %v840 = vpop.f32.mrf.mxu0
        %841 = vmatprep.mubr.f32.mxu0 0.0
        %842 = vmatmul.mubr.f32.gmra.mxu0 %v278
        %v843 = vpop.f32.mrf.mxu0
        %v844 = vadd.f32 %v243, %v843
        %v845 = vpop.f32.mrf.mxu0
        %846 = vmatprep.mubr.f32.mxu0 0.0
        %847 = vmatmul.mubr.f32.gmra.mxu0 %v281
        %v848 = vpop.f32.mrf.mxu0
        %v849 = vadd.f32 %v248, %v848
        %v850 = vpop.f32.mrf.mxu0
        %851 = vmatprep.mubr.f32.mxu0 0.0
        %852 = vmatmul.mubr.f32.gmra.mxu0 %v284
        %v853 = vpop.f32.mrf.mxu0
        %v854 = vadd.f32 %v253, %v853
        %v855 = vpop.f32.mrf.mxu0
        %856 = vmatprep.mubr.f32.mxu0 0.0
        %857 = vmatmul.mubr.f32.gmra.mxu0 %v287
        %v858 = vpop.f32.mrf.mxu0
        %v859 = vadd.f32 %v258, %v858
        %v860 = vpop.f32.mrf.mxu0
        %861 = vmatprep.mubr.f32.mxu0 0.0
        %862 = vmatmul.mubr.f32.gmra.mxu0 %v290
        %v863 = vpop.f32.mrf.mxu0
        %v864 = vadd.f32 %v263, %v863
        %v865 = vpop.f32.mrf.mxu0
        %866 = vmatprep.mubr.f32.mxu0 0.0
        %867 = vmatmul.mubr.f32.gmra.mxu0 %v293
        %v868 = vpop.f32.mrf.mxu0
        %v869 = vadd.f32 %v268, %v868
        %v870 = vpop.f32.mrf.mxu0
        %871 = vdwg.mxu0
        %872 = vst [vmem:[%s207 + $0x20] sm:$0xff] %v834
        %873 = vst [vmem:[%s207 + $0xa0] sm:$0xff] %v839
        %874 = vst [vmem:[%s207 + $0x120] sm:$0xff] %v844
        %875 = vst [vmem:[%s207 + $0x1a0] sm:$0xff] %v849
        %876 = vst [vmem:[%s207 + $0x220] sm:$0xff] %v854
        %877 = vst [vmem:[%s207 + $0x2a0] sm:$0xff] %v859
        %878 = vst [vmem:[%s207 + $0x320] sm:$0xff] %v864
        %879 = vst [vmem:[%s207 + $0x3a0] sm:$0xff] %v869
        %s880 = scalar_lea.vmem %s185, 160 [#allocation2]
        %v881 = vld [vmem:[%s880] sm:$0xff]
        %v882 = vld [vmem:[%s880 + $0x8] sm:$0xff]
        %v883 = vld [vmem:[%s880 + $0x10] sm:$0xff]
        %v884 = vld [vmem:[%s880 + $0x18] sm:$0xff]
        %885 = vmatprep.subr.mxu0 0.0
        %886 = vmatpush1.msra.mxu0 0.0
        %887 = vmatprep.subr.mxu0 0.0
        %888 = vmatpush1.msra.mxu0 0.0
        %889 = vmatprep.subr.mxu0 0.0
        %890 = vmatpush1.msra.mxu0 0.0
        %891 = vmatprep.subr.mxu0 0.0
        %892 = vmatpush1.msra.mxu0 0.0
        %893 = vmatprep.subr.mxu0 0.0
        %894 = vmatpush1.msra.mxu0 0.0
        %895 = vmatprep.subr.mxu0 0.0
        %896 = vmatpush1.msra.mxu0 0.0
        %897 = vmatprep.subr.mxu0 0.0
        %898 = vmatpush1.msra.mxu0 0.0
        %899 = vmatprep.subr.mxu0 0.0
        %900 = vmatpush1.msra.mxu0 0.0
        %901 = vmatprep.subr.mxu0 0.0
        %902 = vmatpush1.msra.mxu0 0.0
        %903 = vmatprep.subr.mxu0 0.0
        %904 = vmatpush1.msra.mxu0 0.0
        %905 = vmatprep.subr.mxu0 0.0
        %906 = vmatpush1.msra.mxu0 0.0
        %907 = vmatprep.subr.mxu0 0.0
        %908 = vmatpush1.msra.mxu0 0.0
        %909 = vmatprep.subr.mxu0 0.0
        %910 = vmatpush1.msra.mxu0 %v884
        %911 = vmatprep.subr.mxu0 0.0
        %912 = vmatpush1.msra.mxu0 %v883
        %913 = vmatprep.subr.mxu0 0.0
        %914 = vmatpush1.msra.mxu0 %v882
        %915 = vmatprep.subr.mxu0 0.0
        %916 = vmatpush1.msra.mxu0 %v881
        %917 = vmatprep.subr.mxu0 0.0
        %918 = vmatpush2.msra.mxu0 0.0
        %919 = vmatprep.subr.mxu0 0.0
        %920 = vmatpush2.msra.mxu0 0.0
        %921 = vmatprep.subr.mxu0 0.0
        %922 = vmatpush2.msra.mxu0 0.0
        %923 = vmatprep.subr.mxu0 0.0
        %924 = vmatpush2.msra.mxu0 0.0
        %925 = vmatprep.subr.mxu0 0.0
        %926 = vmatpush2.msra.mxu0 0.0
        %927 = vmatprep.subr.mxu0 0.0
        %928 = vmatpush2.msra.mxu0 0.0
        %929 = vmatprep.subr.mxu0 0.0
        %930 = vmatpush2.msra.mxu0 0.0
        %931 = vmatprep.subr.mxu0 0.0
        %932 = vmatpush2.msra.mxu0 0.0
        %933 = vmatprep.subr.mxu0 0.0
        %934 = vmatpush2.msra.mxu0 0.0
        %935 = vmatprep.subr.mxu0 0.0
        %936 = vmatpush2.msra.mxu0 0.0
        %937 = vmatprep.subr.mxu0 0.0
        %938 = vmatpush2.msra.mxu0 0.0
        %939 = vmatprep.subr.mxu0 0.0
        %940 = vmatpush2.msra.mxu0 0.0
        %941 = vmatprep.subr.mxu0 0.0
        %942 = vmatpush2.msra.mxu0 0.0
        %943 = vmatprep.subr.mxu0 0.0
        %944 = vmatpush2.msra.mxu0 0.0
        %945 = vmatprep.subr.mxu0 0.0
        %946 = vmatpush2.msra.mxu0 0.0
        %947 = vmatprep.subr.mxu0 0.0
        %948 = vmatpush2.msra.mxu0 0.0
        %949 = vmatprep.mubr.f32.mxu0 0.0
        %950 = vmatmul.mubr.f32.gmra.mxu0 %v272
        %v951 = vpop.f32.mrf.mxu0
        %v952 = vadd.f32 %v233, %v951
        %v953 = vpop.f32.mrf.mxu0
        %954 = vmatprep.mubr.f32.mxu0 0.0
        %955 = vmatmul.mubr.f32.gmra.mxu0 %v275
        %v956 = vpop.f32.mrf.mxu0
        %v957 = vadd.f32 %v238, %v956
        %v958 = vpop.f32.mrf.mxu0
        %959 = vmatprep.mubr.f32.mxu0 0.0
        %960 = vmatmul.mubr.f32.gmra.mxu0 %v278
        %v961 = vpop.f32.mrf.mxu0
        %v962 = vadd.f32 %v243, %v961
        %v963 = vpop.f32.mrf.mxu0
        %964 = vmatprep.mubr.f32.mxu0 0.0
        %965 = vmatmul.mubr.f32.gmra.mxu0 %v281
        %v966 = vpop.f32.mrf.mxu0
        %v967 = vadd.f32 %v248, %v966
        %v968 = vpop.f32.mrf.mxu0
        %969 = vmatprep.mubr.f32.mxu0 0.0
        %970 = vmatmul.mubr.f32.gmra.mxu0 %v284
        %v971 = vpop.f32.mrf.mxu0
        %v972 = vadd.f32 %v253, %v971
        %v973 = vpop.f32.mrf.mxu0
        %974 = vmatprep.mubr.f32.mxu0 0.0
        %975 = vmatmul.mubr.f32.gmra.mxu0 %v287
        %v976 = vpop.f32.mrf.mxu0
        %v977 = vadd.f32 %v258, %v976
        %v978 = vpop.f32.mrf.mxu0
        %979 = vmatprep.mubr.f32.mxu0 0.0
        %980 = vmatmul.mubr.f32.gmra.mxu0 %v290
        %v981 = vpop.f32.mrf.mxu0
        %v982 = vadd.f32 %v263, %v981
        %v983 = vpop.f32.mrf.mxu0
        %984 = vmatprep.mubr.f32.mxu0 0.0
        %985 = vmatmul.mubr.f32.gmra.mxu0 %v293
        %v986 = vpop.f32.mrf.mxu0
        %v987 = vadd.f32 %v268, %v986
        %v988 = vpop.f32.mrf.mxu0
        %989 = vdwg.mxu0
        %990 = vst [vmem:[%s207 + $0x28] sm:$0xff] %v952
        %991 = vst [vmem:[%s207 + $0xa8] sm:$0xff] %v957
        %992 = vst [vmem:[%s207 + $0x128] sm:$0xff] %v962
        %993 = vst [vmem:[%s207 + $0x1a8] sm:$0xff] %v967
        %994 = vst [vmem:[%s207 + $0x228] sm:$0xff] %v972
        %995 = vst [vmem:[%s207 + $0x2a8] sm:$0xff] %v977
        %996 = vst [vmem:[%s207 + $0x328] sm:$0xff] %v982
        %997 = vst [vmem:[%s207 + $0x3a8] sm:$0xff] %v987
        %s998 = scalar_lea.vmem %s185, 192 [#allocation2]
        %v999 = vld [vmem:[%s998] sm:$0xff]
        %v1000 = vld [vmem:[%s998 + $0x8] sm:$0xff]
        %v1001 = vld [vmem:[%s998 + $0x10] sm:$0xff]
        %v1002 = vld [vmem:[%s998 + $0x18] sm:$0xff]
        %1003 = vmatprep.subr.mxu0 0.0
        %1004 = vmatpush1.msra.mxu0 0.0
        %1005 = vmatprep.subr.mxu0 0.0
        %1006 = vmatpush1.msra.mxu0 0.0
        %1007 = vmatprep.subr.mxu0 0.0
        %1008 = vmatpush1.msra.mxu0 0.0
        %1009 = vmatprep.subr.mxu0 0.0
        %1010 = vmatpush1.msra.mxu0 0.0
        %1011 = vmatprep.subr.mxu0 0.0
        %1012 = vmatpush1.msra.mxu0 0.0
        %1013 = vmatprep.subr.mxu0 0.0
        %1014 = vmatpush1.msra.mxu0 0.0
        %1015 = vmatprep.subr.mxu0 0.0
        %1016 = vmatpush1.msra.mxu0 0.0
        %1017 = vmatprep.subr.mxu0 0.0
        %1018 = vmatpush1.msra.mxu0 0.0
        %1019 = vmatprep.subr.mxu0 0.0
        %1020 = vmatpush1.msra.mxu0 0.0
        %1021 = vmatprep.subr.mxu0 0.0
        %1022 = vmatpush1.msra.mxu0 0.0
        %1023 = vmatprep.subr.mxu0 0.0
        %1024 = vmatpush1.msra.mxu0 0.0
        %1025 = vmatprep.subr.mxu0 0.0
        %1026 = vmatpush1.msra.mxu0 0.0
        %1027 = vmatprep.subr.mxu0 0.0
        %1028 = vmatpush1.msra.mxu0 %v1002
        %1029 = vmatprep.subr.mxu0 0.0
        %1030 = vmatpush1.msra.mxu0 %v1001
        %1031 = vmatprep.subr.mxu0 0.0
        %1032 = vmatpush1.msra.mxu0 %v1000
        %1033 = vmatprep.subr.mxu0 0.0
        %1034 = vmatpush1.msra.mxu0 %v999
        %1035 = vmatprep.subr.mxu0 0.0
        %1036 = vmatpush2.msra.mxu0 0.0
        %1037 = vmatprep.subr.mxu0 0.0
        %1038 = vmatpush2.msra.mxu0 0.0
        %1039 = vmatprep.subr.mxu0 0.0
        %1040 = vmatpush2.msra.mxu0 0.0
        %1041 = vmatprep.subr.mxu0 0.0
        %1042 = vmatpush2.msra.mxu0 0.0
        %1043 = vmatprep.subr.mxu0 0.0
        %1044 = vmatpush2.msra.mxu0 0.0
        %1045 = vmatprep.subr.mxu0 0.0
        %1046 = vmatpush2.msra.mxu0 0.0
        %1047 = vmatprep.subr.mxu0 0.0
        %1048 = vmatpush2.msra.mxu0 0.0
        %1049 = vmatprep.subr.mxu0 0.0
        %1050 = vmatpush2.msra.mxu0 0.0
        %1051 = vmatprep.subr.mxu0 0.0
        %1052 = vmatpush2.msra.mxu0 0.0
        %1053 = vmatprep.subr.mxu0 0.0
        %1054 = vmatpush2.msra.mxu0 0.0
        %1055 = vmatprep.subr.mxu0 0.0
        %1056 = vmatpush2.msra.mxu0 0.0
        %1057 = vmatprep.subr.mxu0 0.0
        %1058 = vmatpush2.msra.mxu0 0.0
        %1059 = vmatprep.subr.mxu0 0.0
        %1060 = vmatpush2.msra.mxu0 0.0
        %1061 = vmatprep.subr.mxu0 0.0
        %1062 = vmatpush2.msra.mxu0 0.0
        %1063 = vmatprep.subr.mxu0 0.0
        %1064 = vmatpush2.msra.mxu0 0.0
        %1065 = vmatprep.subr.mxu0 0.0
        %1066 = vmatpush2.msra.mxu0 0.0
        %1067 = vmatprep.mubr.f32.mxu0 0.0
        %1068 = vmatmul.mubr.f32.gmra.mxu0 %v272
        %v1069 = vpop.f32.mrf.mxu0
        %v1070 = vadd.f32 %v233, %v1069
        %v1071 = vpop.f32.mrf.mxu0
        %1072 = vmatprep.mubr.f32.mxu0 0.0
        %1073 = vmatmul.mubr.f32.gmra.mxu0 %v275
        %v1074 = vpop.f32.mrf.mxu0
        %v1075 = vadd.f32 %v238, %v1074
        %v1076 = vpop.f32.mrf.mxu0
        %1077 = vmatprep.mubr.f32.mxu0 0.0
        %1078 = vmatmul.mubr.f32.gmra.mxu0 %v278
        %v1079 = vpop.f32.mrf.mxu0
        %v1080 = vadd.f32 %v243, %v1079
        %v1081 = vpop.f32.mrf.mxu0
        %1082 = vmatprep.mubr.f32.mxu0 0.0
        %1083 = vmatmul.mubr.f32.gmra.mxu0 %v281
        %v1084 = vpop.f32.mrf.mxu0
        %v1085 = vadd.f32 %v248, %v1084
        %v1086 = vpop.f32.mrf.mxu0
        %1087 = vmatprep.mubr.f32.mxu0 0.0
        %1088 = vmatmul.mubr.f32.gmra.mxu0 %v284
        %v1089 = vpop.f32.mrf.mxu0
        %v1090 = vadd.f32 %v253, %v1089
        %v1091 = vpop.f32.mrf.mxu0
        %1092 = vmatprep.mubr.f32.mxu0 0.0
        %1093 = vmatmul.mubr.f32.gmra.mxu0 %v287
        %v1094 = vpop.f32.mrf.mxu0
        %v1095 = vadd.f32 %v258, %v1094
        %v1096 = vpop.f32.mrf.mxu0
        %1097 = vmatprep.mubr.f32.mxu0 0.0
        %1098 = vmatmul.mubr.f32.gmra.mxu0 %v290
        %v1099 = vpop.f32.mrf.mxu0
        %v1100 = vadd.f32 %v263, %v1099
        %v1101 = vpop.f32.mrf.mxu0
        %1102 = vmatprep.mubr.f32.mxu0 0.0
        %1103 = vmatmul.mubr.f32.gmra.mxu0 %v293
        %v1104 = vpop.f32.mrf.mxu0
        %v1105 = vadd.f32 %v268, %v1104
        %v1106 = vpop.f32.mrf.mxu0
        %1107 = vdwg.mxu0
        %1108 = vst [vmem:[%s207 + $0x30] sm:$0xff] %v1070
        %1109 = vst [vmem:[%s207 + $0xb0] sm:$0xff] %v1075
        %1110 = vst [vmem:[%s207 + $0x130] sm:$0xff] %v1080
        %1111 = vst [vmem:[%s207 + $0x1b0] sm:$0xff] %v1085
        %1112 = vst [vmem:[%s207 + $0x230] sm:$0xff] %v1090
        %1113 = vst [vmem:[%s207 + $0x2b0] sm:$0xff] %v1095
        %1114 = vst [vmem:[%s207 + $0x330] sm:$0xff] %v1100
        %1115 = vst [vmem:[%s207 + $0x3b0] sm:$0xff] %v1105
        %s1116 = scalar_lea.vmem %s185, 224 [#allocation2]
        %v1117 = vld [vmem:[%s1116] sm:$0xff]
        %v1118 = vld [vmem:[%s1116 + $0x8] sm:$0xff]
        %v1119 = vld [vmem:[%s1116 + $0x10] sm:$0xff]
        %v1120 = vld [vmem:[%s1116 + $0x18] sm:$0xff]
        %1121 = vmatprep.subr.mxu0 0.0
        %1122 = vmatpush1.msra.mxu0 0.0
        %1123 = vmatprep.subr.mxu0 0.0
        %1124 = vmatpush1.msra.mxu0 0.0
        %1125 = vmatprep.subr.mxu0 0.0
        %1126 = vmatpush1.msra.mxu0 0.0
        %1127 = vmatprep.subr.mxu0 0.0
        %1128 = vmatpush1.msra.mxu0 0.0
        %1129 = vmatprep.subr.mxu0 0.0
        %1130 = vmatpush1.msra.mxu0 0.0
        %1131 = vmatprep.subr.mxu0 0.0
        %1132 = vmatpush1.msra.mxu0 0.0
        %1133 = vmatprep.subr.mxu0 0.0
        %1134 = vmatpush1.msra.mxu0 0.0
        %1135 = vmatprep.subr.mxu0 0.0
        %1136 = vmatpush1.msra.mxu0 0.0
        %1137 = vmatprep.subr.mxu0 0.0
        %1138 = vmatpush1.msra.mxu0 0.0
        %1139 = vmatprep.subr.mxu0 0.0
        %1140 = vmatpush1.msra.mxu0 0.0
        %1141 = vmatprep.subr.mxu0 0.0
        %1142 = vmatpush1.msra.mxu0 0.0
        %1143 = vmatprep.subr.mxu0 0.0
        %1144 = vmatpush1.msra.mxu0 0.0
        %1145 = vmatprep.subr.mxu0 0.0
        %1146 = vmatpush1.msra.mxu0 %v1120
        %1147 = vmatprep.subr.mxu0 0.0
        %1148 = vmatpush1.msra.mxu0 %v1119
        %1149 = vmatprep.subr.mxu0 0.0
        %1150 = vmatpush1.msra.mxu0 %v1118
        %1151 = vmatprep.subr.mxu0 0.0
        %1152 = vmatpush1.msra.mxu0 %v1117
        %1153 = vmatprep.subr.mxu0 0.0
        %1154 = vmatpush2.msra.mxu0 0.0
        %1155 = vmatprep.subr.mxu0 0.0
        %1156 = vmatpush2.msra.mxu0 0.0
        %1157 = vmatprep.subr.mxu0 0.0
        %1158 = vmatpush2.msra.mxu0 0.0
        %1159 = vmatprep.subr.mxu0 0.0
        %1160 = vmatpush2.msra.mxu0 0.0
        %1161 = vmatprep.subr.mxu0 0.0
        %1162 = vmatpush2.msra.mxu0 0.0
        %1163 = vmatprep.subr.mxu0 0.0
        %1164 = vmatpush2.msra.mxu0 0.0
        %1165 = vmatprep.subr.mxu0 0.0
        %1166 = vmatpush2.msra.mxu0 0.0
        %1167 = vmatprep.subr.mxu0 0.0
        %1168 = vmatpush2.msra.mxu0 0.0
        %1169 = vmatprep.subr.mxu0 0.0
        %1170 = vmatpush2.msra.mxu0 0.0
        %1171 = vmatprep.subr.mxu0 0.0
        %1172 = vmatpush2.msra.mxu0 0.0
        %1173 = vmatprep.subr.mxu0 0.0
        %1174 = vmatpush2.msra.mxu0 0.0
        %1175 = vmatprep.subr.mxu0 0.0
        %1176 = vmatpush2.msra.mxu0 0.0
        %1177 = vmatprep.subr.mxu0 0.0
        %1178 = vmatpush2.msra.mxu0 0.0
        %1179 = vmatprep.subr.mxu0 0.0
        %1180 = vmatpush2.msra.mxu0 0.0
        %1181 = vmatprep.subr.mxu0 0.0
        %1182 = vmatpush2.msra.mxu0 0.0
        %1183 = vmatprep.subr.mxu0 0.0
        %1184 = vmatpush2.msra.mxu0 0.0
        %1185 = vmatprep.mubr.f32.mxu0 0.0
        %1186 = vmatmul.mubr.f32.gmra.mxu0 %v272
        %v1187 = vpop.f32.mrf.mxu0
        %v1188 = vadd.f32 %v233, %v1187
        %v1189 = vpop.f32.mrf.mxu0
        %1190 = vmatprep.mubr.f32.mxu0 0.0
        %1191 = vmatmul.mubr.f32.gmra.mxu0 %v275
        %v1192 = vpop.f32.mrf.mxu0
        %v1193 = vadd.f32 %v238, %v1192
        %v1194 = vpop.f32.mrf.mxu0
        %1195 = vmatprep.mubr.f32.mxu0 0.0
        %1196 = vmatmul.mubr.f32.gmra.mxu0 %v278
        %v1197 = vpop.f32.mrf.mxu0
        %v1198 = vadd.f32 %v243, %v1197
        %v1199 = vpop.f32.mrf.mxu0
        %1200 = vmatprep.mubr.f32.mxu0 0.0
        %1201 = vmatmul.mubr.f32.gmra.mxu0 %v281
        %v1202 = vpop.f32.mrf.mxu0
        %v1203 = vadd.f32 %v248, %v1202
        %v1204 = vpop.f32.mrf.mxu0
        %1205 = vmatprep.mubr.f32.mxu0 0.0
        %1206 = vmatmul.mubr.f32.gmra.mxu0 %v284
        %v1207 = vpop.f32.mrf.mxu0
        %v1208 = vadd.f32 %v253, %v1207
        %v1209 = vpop.f32.mrf.mxu0
        %1210 = vmatprep.mubr.f32.mxu0 0.0
        %1211 = vmatmul.mubr.f32.gmra.mxu0 %v287
        %v1212 = vpop.f32.mrf.mxu0
        %v1213 = vadd.f32 %v258, %v1212
        %v1214 = vpop.f32.mrf.mxu0
        %1215 = vmatprep.mubr.f32.mxu0 0.0
        %1216 = vmatmul.mubr.f32.gmra.mxu0 %v290
        %v1217 = vpop.f32.mrf.mxu0
        %v1218 = vadd.f32 %v263, %v1217
        %v1219 = vpop.f32.mrf.mxu0
        %1220 = vmatprep.mubr.f32.mxu0 0.0
        %1221 = vmatmul.mubr.f32.gmra.mxu0 %v293
        %v1222 = vpop.f32.mrf.mxu0
        %v1223 = vadd.f32 %v268, %v1222
        %v1224 = vpop.f32.mrf.mxu0
        %1225 = vdwg.mxu0
        %1226 = vst [vmem:[%s207 + $0x38] sm:$0xff] %v1188
        %1227 = vst [vmem:[%s207 + $0xb8] sm:$0xff] %v1193
        %1228 = vst [vmem:[%s207 + $0x138] sm:$0xff] %v1198
        %1229 = vst [vmem:[%s207 + $0x1b8] sm:$0xff] %v1203
        %1230 = vst [vmem:[%s207 + $0x238] sm:$0xff] %v1208
        %1231 = vst [vmem:[%s207 + $0x2b8] sm:$0xff] %v1213
        %1232 = vst [vmem:[%s207 + $0x338] sm:$0xff] %v1218
        %1233 = vst [vmem:[%s207 + $0x3b8] sm:$0xff] %v1223
        %s1234 = scalar_lea.vmem %s185, 256 [#allocation2]
        %v1235 = vld [vmem:[%s1234] sm:$0xff]
        %v1236 = vld [vmem:[%s1234 + $0x8] sm:$0xff]
        %v1237 = vld [vmem:[%s1234 + $0x10] sm:$0xff]
        %v1238 = vld [vmem:[%s1234 + $0x18] sm:$0xff]
        %1239 = vmatprep.subr.mxu0 0.0
        %1240 = vmatpush1.msra.mxu0 0.0
        %1241 = vmatprep.subr.mxu0 0.0
        %1242 = vmatpush1.msra.mxu0 0.0
        %1243 = vmatprep.subr.mxu0 0.0
        %1244 = vmatpush1.msra.mxu0 0.0
        %1245 = vmatprep.subr.mxu0 0.0
        %1246 = vmatpush1.msra.mxu0 0.0
        %1247 = vmatprep.subr.mxu0 0.0
        %1248 = vmatpush1.msra.mxu0 0.0
        %1249 = vmatprep.subr.mxu0 0.0
        %1250 = vmatpush1.msra.mxu0 0.0
        %1251 = vmatprep.subr.mxu0 0.0
        %1252 = vmatpush1.msra.mxu0 0.0
        %1253 = vmatprep.subr.mxu0 0.0
        %1254 = vmatpush1.msra.mxu0 0.0
        %1255 = vmatprep.subr.mxu0 0.0
        %1256 = vmatpush1.msra.mxu0 0.0
        %1257 = vmatprep.subr.mxu0 0.0
        %1258 = vmatpush1.msra.mxu0 0.0
        %1259 = vmatprep.subr.mxu0 0.0
        %1260 = vmatpush1.msra.mxu0 0.0
        %1261 = vmatprep.subr.mxu0 0.0
        %1262 = vmatpush1.msra.mxu0 0.0
        %1263 = vmatprep.subr.mxu0 0.0
        %1264 = vmatpush1.msra.mxu0 %v1238
        %1265 = vmatprep.subr.mxu0 0.0
        %1266 = vmatpush1.msra.mxu0 %v1237
        %1267 = vmatprep.subr.mxu0 0.0
        %1268 = vmatpush1.msra.mxu0 %v1236
        %1269 = vmatprep.subr.mxu0 0.0
        %1270 = vmatpush1.msra.mxu0 %v1235
        %1271 = vmatprep.subr.mxu0 0.0
        %1272 = vmatpush2.msra.mxu0 0.0
        %1273 = vmatprep.subr.mxu0 0.0
        %1274 = vmatpush2.msra.mxu0 0.0
        %1275 = vmatprep.subr.mxu0 0.0
        %1276 = vmatpush2.msra.mxu0 0.0
        %1277 = vmatprep.subr.mxu0 0.0
        %1278 = vmatpush2.msra.mxu0 0.0
        %1279 = vmatprep.subr.mxu0 0.0
        %1280 = vmatpush2.msra.mxu0 0.0
        %1281 = vmatprep.subr.mxu0 0.0
        %1282 = vmatpush2.msra.mxu0 0.0
        %1283 = vmatprep.subr.mxu0 0.0
        %1284 = vmatpush2.msra.mxu0 0.0
        %1285 = vmatprep.subr.mxu0 0.0
        %1286 = vmatpush2.msra.mxu0 0.0
        %1287 = vmatprep.subr.mxu0 0.0
        %1288 = vmatpush2.msra.mxu0 0.0
        %1289 = vmatprep.subr.mxu0 0.0
        %1290 = vmatpush2.msra.mxu0 0.0
        %1291 = vmatprep.subr.mxu0 0.0
        %1292 = vmatpush2.msra.mxu0 0.0
        %1293 = vmatprep.subr.mxu0 0.0
        %1294 = vmatpush2.msra.mxu0 0.0
        %1295 = vmatprep.subr.mxu0 0.0
        %1296 = vmatpush2.msra.mxu0 0.0
        %1297 = vmatprep.subr.mxu0 0.0
        %1298 = vmatpush2.msra.mxu0 0.0
        %1299 = vmatprep.subr.mxu0 0.0
        %1300 = vmatpush2.msra.mxu0 0.0
        %1301 = vmatprep.subr.mxu0 0.0
        %1302 = vmatpush2.msra.mxu0 0.0
        %1303 = vmatprep.mubr.f32.mxu0 0.0
        %1304 = vmatmul.mubr.f32.gmra.mxu0 %v272
        %v1305 = vpop.f32.mrf.mxu0
        %v1306 = vadd.f32 %v233, %v1305
        %v1307 = vpop.f32.mrf.mxu0
        %1308 = vmatprep.mubr.f32.mxu0 0.0
        %1309 = vmatmul.mubr.f32.gmra.mxu0 %v275
        %v1310 = vpop.f32.mrf.mxu0
        %v1311 = vadd.f32 %v238, %v1310
        %v1312 = vpop.f32.mrf.mxu0
        %1313 = vmatprep.mubr.f32.mxu0 0.0
        %1314 = vmatmul.mubr.f32.gmra.mxu0 %v278
        %v1315 = vpop.f32.mrf.mxu0
        %v1316 = vadd.f32 %v243, %v1315
        %v1317 = vpop.f32.mrf.mxu0
        %1318 = vmatprep.mubr.f32.mxu0 0.0
        %1319 = vmatmul.mubr.f32.gmra.mxu0 %v281
        %v1320 = vpop.f32.mrf.mxu0
        %v1321 = vadd.f32 %v248, %v1320
        %v1322 = vpop.f32.mrf.mxu0
        %1323 = vmatprep.mubr.f32.mxu0 0.0
        %1324 = vmatmul.mubr.f32.gmra.mxu0 %v284
        %v1325 = vpop.f32.mrf.mxu0
        %v1326 = vadd.f32 %v253, %v1325
        %v1327 = vpop.f32.mrf.mxu0
        %1328 = vmatprep.mubr.f32.mxu0 0.0
        %1329 = vmatmul.mubr.f32.gmra.mxu0 %v287
        %v1330 = vpop.f32.mrf.mxu0
        %v1331 = vadd.f32 %v258, %v1330
        %v1332 = vpop.f32.mrf.mxu0
        %1333 = vmatprep.mubr.f32.mxu0 0.0
        %1334 = vmatmul.mubr.f32.gmra.mxu0 %v290
        %v1335 = vpop.f32.mrf.mxu0
        %v1336 = vadd.f32 %v263, %v1335
        %v1337 = vpop.f32.mrf.mxu0
        %1338 = vmatprep.mubr.f32.mxu0 0.0
        %1339 = vmatmul.mubr.f32.gmra.mxu0 %v293
        %v1340 = vpop.f32.mrf.mxu0
        %v1341 = vadd.f32 %v268, %v1340
        %v1342 = vpop.f32.mrf.mxu0
        %1343 = vdwg.mxu0
        %1344 = vst [vmem:[%s207 + $0x40] sm:$0xff] %v1306
        %1345 = vst [vmem:[%s207 + $0xc0] sm:$0xff] %v1311
        %1346 = vst [vmem:[%s207 + $0x140] sm:$0xff] %v1316
        %1347 = vst [vmem:[%s207 + $0x1c0] sm:$0xff] %v1321
        %1348 = vst [vmem:[%s207 + $0x240] sm:$0xff] %v1326
        %1349 = vst [vmem:[%s207 + $0x2c0] sm:$0xff] %v1331
        %1350 = vst [vmem:[%s207 + $0x340] sm:$0xff] %v1336
        %1351 = vst [vmem:[%s207 + $0x3c0] sm:$0xff] %v1341
        %s1352 = scalar_lea.vmem %s185, 288 [#allocation2]
        %v1353 = vld [vmem:[%s1352] sm:$0xff]
        %v1354 = vld [vmem:[%s1352 + $0x8] sm:$0xff]
        %v1355 = vld [vmem:[%s1352 + $0x10] sm:$0xff]
        %v1356 = vld [vmem:[%s1352 + $0x18] sm:$0xff]
        %1357 = vmatprep.subr.mxu0 0.0
        %1358 = vmatpush1.msra.mxu0 0.0
        %1359 = vmatprep.subr.mxu0 0.0
        %1360 = vmatpush1.msra.mxu0 0.0
        %1361 = vmatprep.subr.mxu0 0.0
        %1362 = vmatpush1.msra.mxu0 0.0
        %1363 = vmatprep.subr.mxu0 0.0
        %1364 = vmatpush1.msra.mxu0 0.0
        %1365 = vmatprep.subr.mxu0 0.0
        %1366 = vmatpush1.msra.mxu0 0.0
        %1367 = vmatprep.subr.mxu0 0.0
        %1368 = vmatpush1.msra.mxu0 0.0
        %1369 = vmatprep.subr.mxu0 0.0
        %1370 = vmatpush1.msra.mxu0 0.0
        %1371 = vmatprep.subr.mxu0 0.0
        %1372 = vmatpush1.msra.mxu0 0.0
        %1373 = vmatprep.subr.mxu0 0.0
        %1374 = vmatpush1.msra.mxu0 0.0
        %1375 = vmatprep.subr.mxu0 0.0
        %1376 = vmatpush1.msra.mxu0 0.0
        %1377 = vmatprep.subr.mxu0 0.0
        %1378 = vmatpush1.msra.mxu0 0.0
        %1379 = vmatprep.subr.mxu0 0.0
        %1380 = vmatpush1.msra.mxu0 0.0
        %1381 = vmatprep.subr.mxu0 0.0
        %1382 = vmatpush1.msra.mxu0 %v1356
        %1383 = vmatprep.subr.mxu0 0.0
        %1384 = vmatpush1.msra.mxu0 %v1355
        %1385 = vmatprep.subr.mxu0 0.0
        %1386 = vmatpush1.msra.mxu0 %v1354
        %1387 = vmatprep.subr.mxu0 0.0
        %1388 = vmatpush1.msra.mxu0 %v1353
        %1389 = vmatprep.subr.mxu0 0.0
        %1390 = vmatpush2.msra.mxu0 0.0
        %1391 = vmatprep.subr.mxu0 0.0
        %1392 = vmatpush2.msra.mxu0 0.0
        %1393 = vmatprep.subr.mxu0 0.0
        %1394 = vmatpush2.msra.mxu0 0.0
        %1395 = vmatprep.subr.mxu0 0.0
        %1396 = vmatpush2.msra.mxu0 0.0
        %1397 = vmatprep.subr.mxu0 0.0
        %1398 = vmatpush2.msra.mxu0 0.0
        %1399 = vmatprep.subr.mxu0 0.0
        %1400 = vmatpush2.msra.mxu0 0.0
        %1401 = vmatprep.subr.mxu0 0.0
        %1402 = vmatpush2.msra.mxu0 0.0
        %1403 = vmatprep.subr.mxu0 0.0
        %1404 = vmatpush2.msra.mxu0 0.0
        %1405 = vmatprep.subr.mxu0 0.0
        %1406 = vmatpush2.msra.mxu0 0.0
        %1407 = vmatprep.subr.mxu0 0.0
        %1408 = vmatpush2.msra.mxu0 0.0
        %1409 = vmatprep.subr.mxu0 0.0
        %1410 = vmatpush2.msra.mxu0 0.0
        %1411 = vmatprep.subr.mxu0 0.0
        %1412 = vmatpush2.msra.mxu0 0.0
        %1413 = vmatprep.subr.mxu0 0.0
        %1414 = vmatpush2.msra.mxu0 0.0
        %1415 = vmatprep.subr.mxu0 0.0
        %1416 = vmatpush2.msra.mxu0 0.0
        %1417 = vmatprep.subr.mxu0 0.0
        %1418 = vmatpush2.msra.mxu0 0.0
        %1419 = vmatprep.subr.mxu0 0.0
        %1420 = vmatpush2.msra.mxu0 0.0
        %1421 = vmatprep.mubr.f32.mxu0 0.0
        %1422 = vmatmul.mubr.f32.gmra.mxu0 %v272
        %v1423 = vpop.f32.mrf.mxu0
        %v1424 = vadd.f32 %v233, %v1423
        %v1425 = vpop.f32.mrf.mxu0
        %1426 = vmatprep.mubr.f32.mxu0 0.0
        %1427 = vmatmul.mubr.f32.gmra.mxu0 %v275
        %v1428 = vpop.f32.mrf.mxu0
        %v1429 = vadd.f32 %v238, %v1428
        %v1430 = vpop.f32.mrf.mxu0
        %1431 = vmatprep.mubr.f32.mxu0 0.0
        %1432 = vmatmul.mubr.f32.gmra.mxu0 %v278
        %v1433 = vpop.f32.mrf.mxu0
        %v1434 = vadd.f32 %v243, %v1433
        %v1435 = vpop.f32.mrf.mxu0
        %1436 = vmatprep.mubr.f32.mxu0 0.0
        %1437 = vmatmul.mubr.f32.gmra.mxu0 %v281
        %v1438 = vpop.f32.mrf.mxu0
        %v1439 = vadd.f32 %v248, %v1438
        %v1440 = vpop.f32.mrf.mxu0
        %1441 = vmatprep.mubr.f32.mxu0 0.0
        %1442 = vmatmul.mubr.f32.gmra.mxu0 %v284
        %v1443 = vpop.f32.mrf.mxu0
        %v1444 = vadd.f32 %v253, %v1443
        %v1445 = vpop.f32.mrf.mxu0
        %1446 = vmatprep.mubr.f32.mxu0 0.0
        %1447 = vmatmul.mubr.f32.gmra.mxu0 %v287
        %v1448 = vpop.f32.mrf.mxu0
        %v1449 = vadd.f32 %v258, %v1448
        %v1450 = vpop.f32.mrf.mxu0
        %1451 = vmatprep.mubr.f32.mxu0 0.0
        %1452 = vmatmul.mubr.f32.gmra.mxu0 %v290
        %v1453 = vpop.f32.mrf.mxu0
        %v1454 = vadd.f32 %v263, %v1453
        %v1455 = vpop.f32.mrf.mxu0
        %1456 = vmatprep.mubr.f32.mxu0 0.0
        %1457 = vmatmul.mubr.f32.gmra.mxu0 %v293
        %v1458 = vpop.f32.mrf.mxu0
        %v1459 = vadd.f32 %v268, %v1458
        %v1460 = vpop.f32.mrf.mxu0
        %1461 = vdwg.mxu0
        %1462 = vst [vmem:[%s207 + $0x48] sm:$0xff] %v1424
        %1463 = vst [vmem:[%s207 + $0xc8] sm:$0xff] %v1429
        %1464 = vst [vmem:[%s207 + $0x148] sm:$0xff] %v1434
        %1465 = vst [vmem:[%s207 + $0x1c8] sm:$0xff] %v1439
        %1466 = vst [vmem:[%s207 + $0x248] sm:$0xff] %v1444
        %1467 = vst [vmem:[%s207 + $0x2c8] sm:$0xff] %v1449
        %1468 = vst [vmem:[%s207 + $0x348] sm:$0xff] %v1454
        %1469 = vst [vmem:[%s207 + $0x3c8] sm:$0xff] %v1459
        %s1470 = scalar_lea.vmem %s185, 320 [#allocation2]
        %v1471 = vld [vmem:[%s1470] sm:$0xff]
        %v1472 = vld [vmem:[%s1470 + $0x8] sm:$0xff]
        %v1473 = vld [vmem:[%s1470 + $0x10] sm:$0xff]
        %v1474 = vld [vmem:[%s1470 + $0x18] sm:$0xff]
        %1475 = vmatprep.subr.mxu0 0.0
        %1476 = vmatpush1.msra.mxu0 0.0
        %1477 = vmatprep.subr.mxu0 0.0
        %1478 = vmatpush1.msra.mxu0 0.0
        %1479 = vmatprep.subr.mxu0 0.0
        %1480 = vmatpush1.msra.mxu0 0.0
        %1481 = vmatprep.subr.mxu0 0.0
        %1482 = vmatpush1.msra.mxu0 0.0
        %1483 = vmatprep.subr.mxu0 0.0
        %1484 = vmatpush1.msra.mxu0 0.0
        %1485 = vmatprep.subr.mxu0 0.0
        %1486 = vmatpush1.msra.mxu0 0.0
        %1487 = vmatprep.subr.mxu0 0.0
        %1488 = vmatpush1.msra.mxu0 0.0
        %1489 = vmatprep.subr.mxu0 0.0
        %1490 = vmatpush1.msra.mxu0 0.0
        %1491 = vmatprep.subr.mxu0 0.0
        %1492 = vmatpush1.msra.mxu0 0.0
        %1493 = vmatprep.subr.mxu0 0.0
        %1494 = vmatpush1.msra.mxu0 0.0
        %1495 = vmatprep.subr.mxu0 0.0
        %1496 = vmatpush1.msra.mxu0 0.0
        %1497 = vmatprep.subr.mxu0 0.0
        %1498 = vmatpush1.msra.mxu0 0.0
        %1499 = vmatprep.subr.mxu0 0.0
        %1500 = vmatpush1.msra.mxu0 %v1474
        %1501 = vmatprep.subr.mxu0 0.0
        %1502 = vmatpush1.msra.mxu0 %v1473
        %1503 = vmatprep.subr.mxu0 0.0
        %1504 = vmatpush1.msra.mxu0 %v1472
        %1505 = vmatprep.subr.mxu0 0.0
        %1506 = vmatpush1.msra.mxu0 %v1471
        %1507 = vmatprep.subr.mxu0 0.0
        %1508 = vmatpush2.msra.mxu0 0.0
        %1509 = vmatprep.subr.mxu0 0.0
        %1510 = vmatpush2.msra.mxu0 0.0
        %1511 = vmatprep.subr.mxu0 0.0
        %1512 = vmatpush2.msra.mxu0 0.0
        %1513 = vmatprep.subr.mxu0 0.0
        %1514 = vmatpush2.msra.mxu0 0.0
        %1515 = vmatprep.subr.mxu0 0.0
        %1516 = vmatpush2.msra.mxu0 0.0
        %1517 = vmatprep.subr.mxu0 0.0
        %1518 = vmatpush2.msra.mxu0 0.0
        %1519 = vmatprep.subr.mxu0 0.0
        %1520 = vmatpush2.msra.mxu0 0.0
        %1521 = vmatprep.subr.mxu0 0.0
        %1522 = vmatpush2.msra.mxu0 0.0
        %1523 = vmatprep.subr.mxu0 0.0
        %1524 = vmatpush2.msra.mxu0 0.0
        %1525 = vmatprep.subr.mxu0 0.0
        %1526 = vmatpush2.msra.mxu0 0.0
        %1527 = vmatprep.subr.mxu0 0.0
        %1528 = vmatpush2.msra.mxu0 0.0
        %1529 = vmatprep.subr.mxu0 0.0
        %1530 = vmatpush2.msra.mxu0 0.0
        %1531 = vmatprep.subr.mxu0 0.0
        %1532 = vmatpush2.msra.mxu0 0.0
        %1533 = vmatprep.subr.mxu0 0.0
        %1534 = vmatpush2.msra.mxu0 0.0
        %1535 = vmatprep.subr.mxu0 0.0
        %1536 = vmatpush2.msra.mxu0 0.0
        %1537 = vmatprep.subr.mxu0 0.0
        %1538 = vmatpush2.msra.mxu0 0.0
        %1539 = vmatprep.mubr.f32.mxu0 0.0
        %1540 = vmatmul.mubr.f32.gmra.mxu0 %v272
        %v1541 = vpop.f32.mrf.mxu0
        %v1542 = vadd.f32 %v233, %v1541
        %v1543 = vpop.f32.mrf.mxu0
        %1544 = vmatprep.mubr.f32.mxu0 0.0
        %1545 = vmatmul.mubr.f32.gmra.mxu0 %v275
        %v1546 = vpop.f32.mrf.mxu0
        %v1547 = vadd.f32 %v238, %v1546
        %v1548 = vpop.f32.mrf.mxu0
        %1549 = vmatprep.mubr.f32.mxu0 0.0
        %1550 = vmatmul.mubr.f32.gmra.mxu0 %v278
        %v1551 = vpop.f32.mrf.mxu0
        %v1552 = vadd.f32 %v243, %v1551
        %v1553 = vpop.f32.mrf.mxu0
        %1554 = vmatprep.mubr.f32.mxu0 0.0
        %1555 = vmatmul.mubr.f32.gmra.mxu0 %v281
        %v1556 = vpop.f32.mrf.mxu0
        %v1557 = vadd.f32 %v248, %v1556
        %v1558 = vpop.f32.mrf.mxu0
        %1559 = vmatprep.mubr.f32.mxu0 0.0
        %1560 = vmatmul.mubr.f32.gmra.mxu0 %v284
        %v1561 = vpop.f32.mrf.mxu0
        %v1562 = vadd.f32 %v253, %v1561
        %v1563 = vpop.f32.mrf.mxu0
        %1564 = vmatprep.mubr.f32.mxu0 0.0
        %1565 = vmatmul.mubr.f32.gmra.mxu0 %v287
        %v1566 = vpop.f32.mrf.mxu0
        %v1567 = vadd.f32 %v258, %v1566
        %v1568 = vpop.f32.mrf.mxu0
        %1569 = vmatprep.mubr.f32.mxu0 0.0
        %1570 = vmatmul.mubr.f32.gmra.mxu0 %v290
        %v1571 = vpop.f32.mrf.mxu0
        %v1572 = vadd.f32 %v263, %v1571
        %v1573 = vpop.f32.mrf.mxu0
        %1574 = vmatprep.mubr.f32.mxu0 0.0
        %1575 = vmatmul.mubr.f32.gmra.mxu0 %v293
        %v1576 = vpop.f32.mrf.mxu0
        %v1577 = vadd.f32 %v268, %v1576
        %v1578 = vpop.f32.mrf.mxu0
        %1579 = vdwg.mxu0
        %1580 = vst [vmem:[%s207 + $0x50] sm:$0xff] %v1542
        %1581 = vst [vmem:[%s207 + $0xd0] sm:$0xff] %v1547
        %1582 = vst [vmem:[%s207 + $0x150] sm:$0xff] %v1552
        %1583 = vst [vmem:[%s207 + $0x1d0] sm:$0xff] %v1557
        %1584 = vst [vmem:[%s207 + $0x250] sm:$0xff] %v1562
        %1585 = vst [vmem:[%s207 + $0x2d0] sm:$0xff] %v1567
        %1586 = vst [vmem:[%s207 + $0x350] sm:$0xff] %v1572
        %1587 = vst [vmem:[%s207 + $0x3d0] sm:$0xff] %v1577
        %s1588 = scalar_lea.vmem %s185, 352 [#allocation2]
        %v1589 = vld [vmem:[%s1588] sm:$0xff]
        %v1590 = vld [vmem:[%s1588 + $0x8] sm:$0xff]
        %v1591 = vld [vmem:[%s1588 + $0x10] sm:$0xff]
        %v1592 = vld [vmem:[%s1588 + $0x18] sm:$0xff]
        %1593 = vmatprep.subr.mxu0 0.0
        %1594 = vmatpush1.msra.mxu0 0.0
        %1595 = vmatprep.subr.mxu0 0.0
        %1596 = vmatpush1.msra.mxu0 0.0
        %1597 = vmatprep.subr.mxu0 0.0
        %1598 = vmatpush1.msra.mxu0 0.0
        %1599 = vmatprep.subr.mxu0 0.0
        %1600 = vmatpush1.msra.mxu0 0.0
        %1601 = vmatprep.subr.mxu0 0.0
        %1602 = vmatpush1.msra.mxu0 0.0
        %1603 = vmatprep.subr.mxu0 0.0
        %1604 = vmatpush1.msra.mxu0 0.0
        %1605 = vmatprep.subr.mxu0 0.0
        %1606 = vmatpush1.msra.mxu0 0.0
        %1607 = vmatprep.subr.mxu0 0.0
        %1608 = vmatpush1.msra.mxu0 0.0
        %1609 = vmatprep.subr.mxu0 0.0
        %1610 = vmatpush1.msra.mxu0 0.0
        %1611 = vmatprep.subr.mxu0 0.0
        %1612 = vmatpush1.msra.mxu0 0.0
        %1613 = vmatprep.subr.mxu0 0.0
        %1614 = vmatpush1.msra.mxu0 0.0
        %1615 = vmatprep.subr.mxu0 0.0
        %1616 = vmatpush1.msra.mxu0 0.0
        %1617 = vmatprep.subr.mxu0 0.0
        %1618 = vmatpush1.msra.mxu0 %v1592
        %1619 = vmatprep.subr.mxu0 0.0
        %1620 = vmatpush1.msra.mxu0 %v1591
        %1621 = vmatprep.subr.mxu0 0.0
        %1622 = vmatpush1.msra.mxu0 %v1590
        %1623 = vmatprep.subr.mxu0 0.0
        %1624 = vmatpush1.msra.mxu0 %v1589
        %1625 = vmatprep.subr.mxu0 0.0
        %1626 = vmatpush2.msra.mxu0 0.0
        %1627 = vmatprep.subr.mxu0 0.0
        %1628 = vmatpush2.msra.mxu0 0.0
        %1629 = vmatprep.subr.mxu0 0.0
        %1630 = vmatpush2.msra.mxu0 0.0
        %1631 = vmatprep.subr.mxu0 0.0
        %1632 = vmatpush2.msra.mxu0 0.0
        %1633 = vmatprep.subr.mxu0 0.0
        %1634 = vmatpush2.msra.mxu0 0.0
        %1635 = vmatprep.subr.mxu0 0.0
        %1636 = vmatpush2.msra.mxu0 0.0
        %1637 = vmatprep.subr.mxu0 0.0
        %1638 = vmatpush2.msra.mxu0 0.0
        %1639 = vmatprep.subr.mxu0 0.0
        %1640 = vmatpush2.msra.mxu0 0.0
        %1641 = vmatprep.subr.mxu0 0.0
        %1642 = vmatpush2.msra.mxu0 0.0
        %1643 = vmatprep.subr.mxu0 0.0
        %1644 = vmatpush2.msra.mxu0 0.0
        %1645 = vmatprep.subr.mxu0 0.0
        %1646 = vmatpush2.msra.mxu0 0.0
        %1647 = vmatprep.subr.mxu0 0.0
        %1648 = vmatpush2.msra.mxu0 0.0
        %1649 = vmatprep.subr.mxu0 0.0
        %1650 = vmatpush2.msra.mxu0 0.0
        %1651 = vmatprep.subr.mxu0 0.0
        %1652 = vmatpush2.msra.mxu0 0.0
        %1653 = vmatprep.subr.mxu0 0.0
        %1654 = vmatpush2.msra.mxu0 0.0
        %1655 = vmatprep.subr.mxu0 0.0
        %1656 = vmatpush2.msra.mxu0 0.0
        %1657 = vmatprep.mubr.f32.mxu0 0.0
        %1658 = vmatmul.mubr.f32.gmra.mxu0 %v272
        %v1659 = vpop.f32.mrf.mxu0
        %v1660 = vadd.f32 %v233, %v1659
        %v1661 = vpop.f32.mrf.mxu0
        %1662 = vmatprep.mubr.f32.mxu0 0.0
        %1663 = vmatmul.mubr.f32.gmra.mxu0 %v275
        %v1664 = vpop.f32.mrf.mxu0
        %v1665 = vadd.f32 %v238, %v1664
        %v1666 = vpop.f32.mrf.mxu0
        %1667 = vmatprep.mubr.f32.mxu0 0.0
        %1668 = vmatmul.mubr.f32.gmra.mxu0 %v278
        %v1669 = vpop.f32.mrf.mxu0
        %v1670 = vadd.f32 %v243, %v1669
        %v1671 = vpop.f32.mrf.mxu0
        %1672 = vmatprep.mubr.f32.mxu0 0.0
        %1673 = vmatmul.mubr.f32.gmra.mxu0 %v281
        %v1674 = vpop.f32.mrf.mxu0
        %v1675 = vadd.f32 %v248, %v1674
        %v1676 = vpop.f32.mrf.mxu0
        %1677 = vmatprep.mubr.f32.mxu0 0.0
        %1678 = vmatmul.mubr.f32.gmra.mxu0 %v284
        %v1679 = vpop.f32.mrf.mxu0
        %v1680 = vadd.f32 %v253, %v1679
        %v1681 = vpop.f32.mrf.mxu0
        %1682 = vmatprep.mubr.f32.mxu0 0.0
        %1683 = vmatmul.mubr.f32.gmra.mxu0 %v287
        %v1684 = vpop.f32.mrf.mxu0
        %v1685 = vadd.f32 %v258, %v1684
        %v1686 = vpop.f32.mrf.mxu0
        %1687 = vmatprep.mubr.f32.mxu0 0.0
        %1688 = vmatmul.mubr.f32.gmra.mxu0 %v290
        %v1689 = vpop.f32.mrf.mxu0
        %v1690 = vadd.f32 %v263, %v1689
        %v1691 = vpop.f32.mrf.mxu0
        %1692 = vmatprep.mubr.f32.mxu0 0.0
        %1693 = vmatmul.mubr.f32.gmra.mxu0 %v293
        %v1694 = vpop.f32.mrf.mxu0
        %v1695 = vadd.f32 %v268, %v1694
        %v1696 = vpop.f32.mrf.mxu0
        %1697 = vdwg.mxu0
        %1698 = vst [vmem:[%s207 + $0x58] sm:$0xff] %v1660
        %1699 = vst [vmem:[%s207 + $0xd8] sm:$0xff] %v1665
        %1700 = vst [vmem:[%s207 + $0x158] sm:$0xff] %v1670
        %1701 = vst [vmem:[%s207 + $0x1d8] sm:$0xff] %v1675
        %1702 = vst [vmem:[%s207 + $0x258] sm:$0xff] %v1680
        %1703 = vst [vmem:[%s207 + $0x2d8] sm:$0xff] %v1685
        %1704 = vst [vmem:[%s207 + $0x358] sm:$0xff] %v1690
        %1705 = vst [vmem:[%s207 + $0x3d8] sm:$0xff] %v1695
        %s1706 = scalar_lea.vmem %s185, 384 [#allocation2]
        %v1707 = vld [vmem:[%s1706] sm:$0xff]
        %v1708 = vld [vmem:[%s1706 + $0x8] sm:$0xff]
        %v1709 = vld [vmem:[%s1706 + $0x10] sm:$0xff]
        %v1710 = vld [vmem:[%s1706 + $0x18] sm:$0xff]
        %1711 = vmatprep.subr.mxu0 0.0
        %1712 = vmatpush1.msra.mxu0 0.0
        %1713 = vmatprep.subr.mxu0 0.0
        %1714 = vmatpush1.msra.mxu0 0.0
        %1715 = vmatprep.subr.mxu0 0.0
        %1716 = vmatpush1.msra.mxu0 0.0
        %1717 = vmatprep.subr.mxu0 0.0
        %1718 = vmatpush1.msra.mxu0 0.0
        %1719 = vmatprep.subr.mxu0 0.0
        %1720 = vmatpush1.msra.mxu0 0.0
        %1721 = vmatprep.subr.mxu0 0.0
        %1722 = vmatpush1.msra.mxu0 0.0
        %1723 = vmatprep.subr.mxu0 0.0
        %1724 = vmatpush1.msra.mxu0 0.0
        %1725 = vmatprep.subr.mxu0 0.0
        %1726 = vmatpush1.msra.mxu0 0.0
        %1727 = vmatprep.subr.mxu0 0.0
        %1728 = vmatpush1.msra.mxu0 0.0
        %1729 = vmatprep.subr.mxu0 0.0
        %1730 = vmatpush1.msra.mxu0 0.0
        %1731 = vmatprep.subr.mxu0 0.0
        %1732 = vmatpush1.msra.mxu0 0.0
        %1733 = vmatprep.subr.mxu0 0.0
        %1734 = vmatpush1.msra.mxu0 0.0
        %1735 = vmatprep.subr.mxu0 0.0
        %1736 = vmatpush1.msra.mxu0 %v1710
        %1737 = vmatprep.subr.mxu0 0.0
        %1738 = vmatpush1.msra.mxu0 %v1709
        %1739 = vmatprep.subr.mxu0 0.0
        %1740 = vmatpush1.msra.mxu0 %v1708
        %1741 = vmatprep.subr.mxu0 0.0
        %1742 = vmatpush1.msra.mxu0 %v1707
        %1743 = vmatprep.subr.mxu0 0.0
        %1744 = vmatpush2.msra.mxu0 0.0
        %1745 = vmatprep.subr.mxu0 0.0
        %1746 = vmatpush2.msra.mxu0 0.0
        %1747 = vmatprep.subr.mxu0 0.0
        %1748 = vmatpush2.msra.mxu0 0.0
        %1749 = vmatprep.subr.mxu0 0.0
        %1750 = vmatpush2.msra.mxu0 0.0
        %1751 = vmatprep.subr.mxu0 0.0
        %1752 = vmatpush2.msra.mxu0 0.0
        %1753 = vmatprep.subr.mxu0 0.0
        %1754 = vmatpush2.msra.mxu0 0.0
        %1755 = vmatprep.subr.mxu0 0.0
        %1756 = vmatpush2.msra.mxu0 0.0
        %1757 = vmatprep.subr.mxu0 0.0
        %1758 = vmatpush2.msra.mxu0 0.0
        %1759 = vmatprep.subr.mxu0 0.0
        %1760 = vmatpush2.msra.mxu0 0.0
        %1761 = vmatprep.subr.mxu0 0.0
        %1762 = vmatpush2.msra.mxu0 0.0
        %1763 = vmatprep.subr.mxu0 0.0
        %1764 = vmatpush2.msra.mxu0 0.0
        %1765 = vmatprep.subr.mxu0 0.0
        %1766 = vmatpush2.msra.mxu0 0.0
        %1767 = vmatprep.subr.mxu0 0.0
        %1768 = vmatpush2.msra.mxu0 0.0
        %1769 = vmatprep.subr.mxu0 0.0
        %1770 = vmatpush2.msra.mxu0 0.0
        %1771 = vmatprep.subr.mxu0 0.0
        %1772 = vmatpush2.msra.mxu0 0.0
        %1773 = vmatprep.subr.mxu0 0.0
        %1774 = vmatpush2.msra.mxu0 0.0
        %1775 = vmatprep.mubr.f32.mxu0 0.0
        %1776 = vmatmul.mubr.f32.gmra.mxu0 %v272
        %v1777 = vpop.f32.mrf.mxu0
        %v1778 = vadd.f32 %v233, %v1777
        %v1779 = vpop.f32.mrf.mxu0
        %1780 = vmatprep.mubr.f32.mxu0 0.0
        %1781 = vmatmul.mubr.f32.gmra.mxu0 %v275
        %v1782 = vpop.f32.mrf.mxu0
        %v1783 = vadd.f32 %v238, %v1782
        %v1784 = vpop.f32.mrf.mxu0
        %1785 = vmatprep.mubr.f32.mxu0 0.0
        %1786 = vmatmul.mubr.f32.gmra.mxu0 %v278
        %v1787 = vpop.f32.mrf.mxu0
        %v1788 = vadd.f32 %v243, %v1787
        %v1789 = vpop.f32.mrf.mxu0
        %1790 = vmatprep.mubr.f32.mxu0 0.0
        %1791 = vmatmul.mubr.f32.gmra.mxu0 %v281
        %v1792 = vpop.f32.mrf.mxu0
        %v1793 = vadd.f32 %v248, %v1792
        %v1794 = vpop.f32.mrf.mxu0
        %1795 = vmatprep.mubr.f32.mxu0 0.0
        %1796 = vmatmul.mubr.f32.gmra.mxu0 %v284
        %v1797 = vpop.f32.mrf.mxu0
        %v1798 = vadd.f32 %v253, %v1797
        %v1799 = vpop.f32.mrf.mxu0
        %1800 = vmatprep.mubr.f32.mxu0 0.0
        %1801 = vmatmul.mubr.f32.gmra.mxu0 %v287
        %v1802 = vpop.f32.mrf.mxu0
        %v1803 = vadd.f32 %v258, %v1802
        %v1804 = vpop.f32.mrf.mxu0
        %1805 = vmatprep.mubr.f32.mxu0 0.0
        %1806 = vmatmul.mubr.f32.gmra.mxu0 %v290
        %v1807 = vpop.f32.mrf.mxu0
        %v1808 = vadd.f32 %v263, %v1807
        %v1809 = vpop.f32.mrf.mxu0
        %1810 = vmatprep.mubr.f32.mxu0 0.0
        %1811 = vmatmul.mubr.f32.gmra.mxu0 %v293
        %v1812 = vpop.f32.mrf.mxu0
        %v1813 = vadd.f32 %v268, %v1812
        %v1814 = vpop.f32.mrf.mxu0
        %1815 = vdwg.mxu0
        %1816 = vst [vmem:[%s207 + $0x60] sm:$0xff] %v1778
        %1817 = vst [vmem:[%s207 + $0xe0] sm:$0xff] %v1783
        %1818 = vst [vmem:[%s207 + $0x160] sm:$0xff] %v1788
        %1819 = vst [vmem:[%s207 + $0x1e0] sm:$0xff] %v1793
        %1820 = vst [vmem:[%s207 + $0x260] sm:$0xff] %v1798
        %1821 = vst [vmem:[%s207 + $0x2e0] sm:$0xff] %v1803
        %1822 = vst [vmem:[%s207 + $0x360] sm:$0xff] %v1808
        %1823 = vst [vmem:[%s207 + $0x3e0] sm:$0xff] %v1813
        %s1824 = scalar_lea.vmem %s185, 416 [#allocation2]
        %v1825 = vld [vmem:[%s1824] sm:$0xff]
        %v1826 = vld [vmem:[%s1824 + $0x8] sm:$0xff]
        %v1827 = vld [vmem:[%s1824 + $0x10] sm:$0xff]
        %v1828 = vld [vmem:[%s1824 + $0x18] sm:$0xff]
        %1829 = vmatprep.subr.mxu0 0.0
        %1830 = vmatpush1.msra.mxu0 0.0
        %1831 = vmatprep.subr.mxu0 0.0
        %1832 = vmatpush1.msra.mxu0 0.0
        %1833 = vmatprep.subr.mxu0 0.0
        %1834 = vmatpush1.msra.mxu0 0.0
        %1835 = vmatprep.subr.mxu0 0.0
        %1836 = vmatpush1.msra.mxu0 0.0
        %1837 = vmatprep.subr.mxu0 0.0
        %1838 = vmatpush1.msra.mxu0 0.0
        %1839 = vmatprep.subr.mxu0 0.0
        %1840 = vmatpush1.msra.mxu0 0.0
        %1841 = vmatprep.subr.mxu0 0.0
        %1842 = vmatpush1.msra.mxu0 0.0
        %1843 = vmatprep.subr.mxu0 0.0
        %1844 = vmatpush1.msra.mxu0 0.0
        %1845 = vmatprep.subr.mxu0 0.0
        %1846 = vmatpush1.msra.mxu0 0.0
        %1847 = vmatprep.subr.mxu0 0.0
        %1848 = vmatpush1.msra.mxu0 0.0
        %1849 = vmatprep.subr.mxu0 0.0
        %1850 = vmatpush1.msra.mxu0 0.0
        %1851 = vmatprep.subr.mxu0 0.0
        %1852 = vmatpush1.msra.mxu0 0.0
        %1853 = vmatprep.subr.mxu0 0.0
        %1854 = vmatpush1.msra.mxu0 %v1828
        %1855 = vmatprep.subr.mxu0 0.0
        %1856 = vmatpush1.msra.mxu0 %v1827
        %1857 = vmatprep.subr.mxu0 0.0
        %1858 = vmatpush1.msra.mxu0 %v1826
        %1859 = vmatprep.subr.mxu0 0.0
        %1860 = vmatpush1.msra.mxu0 %v1825
        %1861 = vmatprep.subr.mxu0 0.0
        %1862 = vmatpush2.msra.mxu0 0.0
        %1863 = vmatprep.subr.mxu0 0.0
        %1864 = vmatpush2.msra.mxu0 0.0
        %1865 = vmatprep.subr.mxu0 0.0
        %1866 = vmatpush2.msra.mxu0 0.0
        %1867 = vmatprep.subr.mxu0 0.0
        %1868 = vmatpush2.msra.mxu0 0.0
        %1869 = vmatprep.subr.mxu0 0.0
        %1870 = vmatpush2.msra.mxu0 0.0
        %1871 = vmatprep.subr.mxu0 0.0
        %1872 = vmatpush2.msra.mxu0 0.0
        %1873 = vmatprep.subr.mxu0 0.0
        %1874 = vmatpush2.msra.mxu0 0.0
        %1875 = vmatprep.subr.mxu0 0.0
        %1876 = vmatpush2.msra.mxu0 0.0
        %1877 = vmatprep.subr.mxu0 0.0
        %1878 = vmatpush2.msra.mxu0 0.0
        %1879 = vmatprep.subr.mxu0 0.0
        %1880 = vmatpush2.msra.mxu0 0.0
        %1881 = vmatprep.subr.mxu0 0.0
        %1882 = vmatpush2.msra.mxu0 0.0
        %1883 = vmatprep.subr.mxu0 0.0
        %1884 = vmatpush2.msra.mxu0 0.0
        %1885 = vmatprep.subr.mxu0 0.0
        %1886 = vmatpush2.msra.mxu0 0.0
        %1887 = vmatprep.subr.mxu0 0.0
        %1888 = vmatpush2.msra.mxu0 0.0
        %1889 = vmatprep.subr.mxu0 0.0
        %1890 = vmatpush2.msra.mxu0 0.0
        %1891 = vmatprep.subr.mxu0 0.0
        %1892 = vmatpush2.msra.mxu0 0.0
        %1893 = vmatprep.mubr.f32.mxu0 0.0
        %1894 = vmatmul.mubr.f32.gmra.mxu0 %v272
        %v1895 = vpop.f32.mrf.mxu0
        %v1896 = vadd.f32 %v233, %v1895
        %v1897 = vpop.f32.mrf.mxu0
        %1898 = vmatprep.mubr.f32.mxu0 0.0
        %1899 = vmatmul.mubr.f32.gmra.mxu0 %v275
        %v1900 = vpop.f32.mrf.mxu0
        %v1901 = vadd.f32 %v238, %v1900
        %v1902 = vpop.f32.mrf.mxu0
        %1903 = vmatprep.mubr.f32.mxu0 0.0
        %1904 = vmatmul.mubr.f32.gmra.mxu0 %v278
        %v1905 = vpop.f32.mrf.mxu0
        %v1906 = vadd.f32 %v243, %v1905
        %v1907 = vpop.f32.mrf.mxu0
        %1908 = vmatprep.mubr.f32.mxu0 0.0
        %1909 = vmatmul.mubr.f32.gmra.mxu0 %v281
        %v1910 = vpop.f32.mrf.mxu0
        %v1911 = vadd.f32 %v248, %v1910
        %v1912 = vpop.f32.mrf.mxu0
        %1913 = vmatprep.mubr.f32.mxu0 0.0
        %1914 = vmatmul.mubr.f32.gmra.mxu0 %v284
        %v1915 = vpop.f32.mrf.mxu0
        %v1916 = vadd.f32 %v253, %v1915
        %v1917 = vpop.f32.mrf.mxu0
        %1918 = vmatprep.mubr.f32.mxu0 0.0
        %1919 = vmatmul.mubr.f32.gmra.mxu0 %v287
        %v1920 = vpop.f32.mrf.mxu0
        %v1921 = vadd.f32 %v258, %v1920
        %v1922 = vpop.f32.mrf.mxu0
        %1923 = vmatprep.mubr.f32.mxu0 0.0
        %1924 = vmatmul.mubr.f32.gmra.mxu0 %v290
        %v1925 = vpop.f32.mrf.mxu0
        %v1926 = vadd.f32 %v263, %v1925
        %v1927 = vpop.f32.mrf.mxu0
        %1928 = vmatprep.mubr.f32.mxu0 0.0
        %1929 = vmatmul.mubr.f32.gmra.mxu0 %v293
        %v1930 = vpop.f32.mrf.mxu0
        %v1931 = vadd.f32 %v268, %v1930
        %v1932 = vpop.f32.mrf.mxu0
        %1933 = vdwg.mxu0
        %1934 = vst [vmem:[%s207 + $0x68] sm:$0xff] %v1896
        %1935 = vst [vmem:[%s207 + $0xe8] sm:$0xff] %v1901
        %1936 = vst [vmem:[%s207 + $0x168] sm:$0xff] %v1906
        %1937 = vst [vmem:[%s207 + $0x1e8] sm:$0xff] %v1911
        %1938 = vst [vmem:[%s207 + $0x268] sm:$0xff] %v1916
        %1939 = vst [vmem:[%s207 + $0x2e8] sm:$0xff] %v1921
        %1940 = vst [vmem:[%s207 + $0x368] sm:$0xff] %v1926
        %1941 = vst [vmem:[%s207 + $0x3e8] sm:$0xff] %v1931
        %s1942 = scalar_lea.vmem %s185, 448 [#allocation2]
        %v1943 = vld [vmem:[%s1942] sm:$0xff]
        %v1944 = vld [vmem:[%s1942 + $0x8] sm:$0xff]
        %v1945 = vld [vmem:[%s1942 + $0x10] sm:$0xff]
        %v1946 = vld [vmem:[%s1942 + $0x18] sm:$0xff]
        %1947 = vmatprep.subr.mxu0 0.0
        %1948 = vmatpush1.msra.mxu0 0.0
        %1949 = vmatprep.subr.mxu0 0.0
        %1950 = vmatpush1.msra.mxu0 0.0
        %1951 = vmatprep.subr.mxu0 0.0
        %1952 = vmatpush1.msra.mxu0 0.0
        %1953 = vmatprep.subr.mxu0 0.0
        %1954 = vmatpush1.msra.mxu0 0.0
        %1955 = vmatprep.subr.mxu0 0.0
        %1956 = vmatpush1.msra.mxu0 0.0
        %1957 = vmatprep.subr.mxu0 0.0
        %1958 = vmatpush1.msra.mxu0 0.0
        %1959 = vmatprep.subr.mxu0 0.0
        %1960 = vmatpush1.msra.mxu0 0.0
        %1961 = vmatprep.subr.mxu0 0.0
        %1962 = vmatpush1.msra.mxu0 0.0
        %1963 = vmatprep.subr.mxu0 0.0
        %1964 = vmatpush1.msra.mxu0 0.0
        %1965 = vmatprep.subr.mxu0 0.0
        %1966 = vmatpush1.msra.mxu0 0.0
        %1967 = vmatprep.subr.mxu0 0.0
        %1968 = vmatpush1.msra.mxu0 0.0
        %1969 = vmatprep.subr.mxu0 0.0
        %1970 = vmatpush1.msra.mxu0 0.0
        %1971 = vmatprep.subr.mxu0 0.0
        %1972 = vmatpush1.msra.mxu0 %v1946
        %1973 = vmatprep.subr.mxu0 0.0
        %1974 = vmatpush1.msra.mxu0 %v1945
        %1975 = vmatprep.subr.mxu0 0.0
        %1976 = vmatpush1.msra.mxu0 %v1944
        %1977 = vmatprep.subr.mxu0 0.0
        %1978 = vmatpush1.msra.mxu0 %v1943
        %1979 = vmatprep.subr.mxu0 0.0
        %1980 = vmatpush2.msra.mxu0 0.0
        %1981 = vmatprep.subr.mxu0 0.0
        %1982 = vmatpush2.msra.mxu0 0.0
        %1983 = vmatprep.subr.mxu0 0.0
        %1984 = vmatpush2.msra.mxu0 0.0
        %1985 = vmatprep.subr.mxu0 0.0
        %1986 = vmatpush2.msra.mxu0 0.0
        %1987 = vmatprep.subr.mxu0 0.0
        %1988 = vmatpush2.msra.mxu0 0.0
        %1989 = vmatprep.subr.mxu0 0.0
        %1990 = vmatpush2.msra.mxu0 0.0
        %1991 = vmatprep.subr.mxu0 0.0
        %1992 = vmatpush2.msra.mxu0 0.0
        %1993 = vmatprep.subr.mxu0 0.0
        %1994 = vmatpush2.msra.mxu0 0.0
        %1995 = vmatprep.subr.mxu0 0.0
        %1996 = vmatpush2.msra.mxu0 0.0
        %1997 = vmatprep.subr.mxu0 0.0
        %1998 = vmatpush2.msra.mxu0 0.0
        %1999 = vmatprep.subr.mxu0 0.0
        %2000 = vmatpush2.msra.mxu0 0.0
        %2001 = vmatprep.subr.mxu0 0.0
        %2002 = vmatpush2.msra.mxu0 0.0
        %2003 = vmatprep.subr.mxu0 0.0
        %2004 = vmatpush2.msra.mxu0 0.0
        %2005 = vmatprep.subr.mxu0 0.0
        %2006 = vmatpush2.msra.mxu0 0.0
        %2007 = vmatprep.subr.mxu0 0.0
        %2008 = vmatpush2.msra.mxu0 0.0
        %2009 = vmatprep.subr.mxu0 0.0
        %2010 = vmatpush2.msra.mxu0 0.0
        %2011 = vmatprep.mubr.f32.mxu0 0.0
        %2012 = vmatmul.mubr.f32.gmra.mxu0 %v272
        %v2013 = vpop.f32.mrf.mxu0
        %v2014 = vadd.f32 %v233, %v2013
        %v2015 = vpop.f32.mrf.mxu0
        %2016 = vmatprep.mubr.f32.mxu0 0.0
        %2017 = vmatmul.mubr.f32.gmra.mxu0 %v275
        %v2018 = vpop.f32.mrf.mxu0
        %v2019 = vadd.f32 %v238, %v2018
        %v2020 = vpop.f32.mrf.mxu0
        %2021 = vmatprep.mubr.f32.mxu0 0.0
        %2022 = vmatmul.mubr.f32.gmra.mxu0 %v278
        %v2023 = vpop.f32.mrf.mxu0
        %v2024 = vadd.f32 %v243, %v2023
        %v2025 = vpop.f32.mrf.mxu0
        %2026 = vmatprep.mubr.f32.mxu0 0.0
        %2027 = vmatmul.mubr.f32.gmra.mxu0 %v281
        %v2028 = vpop.f32.mrf.mxu0
        %v2029 = vadd.f32 %v248, %v2028
        %v2030 = vpop.f32.mrf.mxu0
        %2031 = vmatprep.mubr.f32.mxu0 0.0
        %2032 = vmatmul.mubr.f32.gmra.mxu0 %v284
        %v2033 = vpop.f32.mrf.mxu0
        %v2034 = vadd.f32 %v253, %v2033
        %v2035 = vpop.f32.mrf.mxu0
        %2036 = vmatprep.mubr.f32.mxu0 0.0
        %2037 = vmatmul.mubr.f32.gmra.mxu0 %v287
        %v2038 = vpop.f32.mrf.mxu0
        %v2039 = vadd.f32 %v258, %v2038
        %v2040 = vpop.f32.mrf.mxu0
        %2041 = vmatprep.mubr.f32.mxu0 0.0
        %2042 = vmatmul.mubr.f32.gmra.mxu0 %v290
        %v2043 = vpop.f32.mrf.mxu0
        %v2044 = vadd.f32 %v263, %v2043
        %v2045 = vpop.f32.mrf.mxu0
        %2046 = vmatprep.mubr.f32.mxu0 0.0
        %2047 = vmatmul.mubr.f32.gmra.mxu0 %v293
        %v2048 = vpop.f32.mrf.mxu0
        %v2049 = vadd.f32 %v268, %v2048
        %v2050 = vpop.f32.mrf.mxu0
        %2051 = vdwg.mxu0
        %2052 = vst [vmem:[%s207 + $0x70] sm:$0xff] %v2014
        %2053 = vst [vmem:[%s207 + $0xf0] sm:$0xff] %v2019
        %2054 = vst [vmem:[%s207 + $0x170] sm:$0xff] %v2024
        %2055 = vst [vmem:[%s207 + $0x1f0] sm:$0xff] %v2029
        %2056 = vst [vmem:[%s207 + $0x270] sm:$0xff] %v2034
        %2057 = vst [vmem:[%s207 + $0x2f0] sm:$0xff] %v2039
        %2058 = vst [vmem:[%s207 + $0x370] sm:$0xff] %v2044
        %2059 = vst [vmem:[%s207 + $0x3f0] sm:$0xff] %v2049
        %s2060 = scalar_lea.vmem %s185, 480 [#allocation2]
        %v2061 = vld [vmem:[%s2060] sm:$0xff]
        %v2062 = vld [vmem:[%s2060 + $0x8] sm:$0xff]
        %v2063 = vld [vmem:[%s2060 + $0x10] sm:$0xff]
        %v2064 = vld [vmem:[%s2060 + $0x18] sm:$0xff]
        %2065 = vmatprep.subr.mxu0 0.0
        %2066 = vmatpush1.msra.mxu0 0.0
        %2067 = vmatprep.subr.mxu0 0.0
        %2068 = vmatpush1.msra.mxu0 0.0
        %2069 = vmatprep.subr.mxu0 0.0
        %2070 = vmatpush1.msra.mxu0 0.0
        %2071 = vmatprep.subr.mxu0 0.0
        %2072 = vmatpush1.msra.mxu0 0.0
        %2073 = vmatprep.subr.mxu0 0.0
        %2074 = vmatpush1.msra.mxu0 0.0
        %2075 = vmatprep.subr.mxu0 0.0
        %2076 = vmatpush1.msra.mxu0 0.0
        %2077 = vmatprep.subr.mxu0 0.0
        %2078 = vmatpush1.msra.mxu0 0.0
        %2079 = vmatprep.subr.mxu0 0.0
        %2080 = vmatpush1.msra.mxu0 0.0
        %2081 = vmatprep.subr.mxu0 0.0
        %2082 = vmatpush1.msra.mxu0 0.0
        %2083 = vmatprep.subr.mxu0 0.0
        %2084 = vmatpush1.msra.mxu0 0.0
        %2085 = vmatprep.subr.mxu0 0.0
        %2086 = vmatpush1.msra.mxu0 0.0
        %2087 = vmatprep.subr.mxu0 0.0
        %2088 = vmatpush1.msra.mxu0 0.0
        %2089 = vmatprep.subr.mxu0 0.0
        %2090 = vmatpush1.msra.mxu0 %v2064
        %2091 = vmatprep.subr.mxu0 0.0
        %2092 = vmatpush1.msra.mxu0 %v2063
        %2093 = vmatprep.subr.mxu0 0.0
        %2094 = vmatpush1.msra.mxu0 %v2062
        %2095 = vmatprep.subr.mxu0 0.0
        %2096 = vmatpush1.msra.mxu0 %v2061
        %2097 = vmatprep.subr.mxu0 0.0
        %2098 = vmatpush2.msra.mxu0 0.0
        %2099 = vmatprep.subr.mxu0 0.0
        %2100 = vmatpush2.msra.mxu0 0.0
        %2101 = vmatprep.subr.mxu0 0.0
        %2102 = vmatpush2.msra.mxu0 0.0
        %2103 = vmatprep.subr.mxu0 0.0
        %2104 = vmatpush2.msra.mxu0 0.0
        %2105 = vmatprep.subr.mxu0 0.0
        %2106 = vmatpush2.msra.mxu0 0.0
        %2107 = vmatprep.subr.mxu0 0.0
        %2108 = vmatpush2.msra.mxu0 0.0
        %2109 = vmatprep.subr.mxu0 0.0
        %2110 = vmatpush2.msra.mxu0 0.0
        %2111 = vmatprep.subr.mxu0 0.0
        %2112 = vmatpush2.msra.mxu0 0.0
        %2113 = vmatprep.subr.mxu0 0.0
        %2114 = vmatpush2.msra.mxu0 0.0
        %2115 = vmatprep.subr.mxu0 0.0
        %2116 = vmatpush2.msra.mxu0 0.0
        %2117 = vmatprep.subr.mxu0 0.0
        %2118 = vmatpush2.msra.mxu0 0.0
        %2119 = vmatprep.subr.mxu0 0.0
        %2120 = vmatpush2.msra.mxu0 0.0
        %2121 = vmatprep.subr.mxu0 0.0
        %2122 = vmatpush2.msra.mxu0 0.0
        %2123 = vmatprep.subr.mxu0 0.0
        %2124 = vmatpush2.msra.mxu0 0.0
        %2125 = vmatprep.subr.mxu0 0.0
        %2126 = vmatpush2.msra.mxu0 0.0
        %2127 = vmatprep.subr.mxu0 0.0
        %2128 = vmatpush2.msra.mxu0 0.0
        %2129 = vmatprep.mubr.f32.mxu0 0.0
        %2130 = vmatmul.mubr.f32.gmra.mxu0 %v272
        %v2131 = vpop.f32.mrf.mxu0
        %v2132 = vadd.f32 %v233, %v2131
        %v2133 = vpop.f32.mrf.mxu0
        %2134 = vmatprep.mubr.f32.mxu0 0.0
        %2135 = vmatmul.mubr.f32.gmra.mxu0 %v275
        %v2136 = vpop.f32.mrf.mxu0
        %v2137 = vadd.f32 %v238, %v2136
        %v2138 = vpop.f32.mrf.mxu0
        %2139 = vmatprep.mubr.f32.mxu0 0.0
        %2140 = vmatmul.mubr.f32.gmra.mxu0 %v278
        %v2141 = vpop.f32.mrf.mxu0
        %v2142 = vadd.f32 %v243, %v2141
        %v2143 = vpop.f32.mrf.mxu0
        %2144 = vmatprep.mubr.f32.mxu0 0.0
        %2145 = vmatmul.mubr.f32.gmra.mxu0 %v281
        %v2146 = vpop.f32.mrf.mxu0
        %v2147 = vadd.f32 %v248, %v2146
        %v2148 = vpop.f32.mrf.mxu0
        %2149 = vmatprep.mubr.f32.mxu0 0.0
        %2150 = vmatmul.mubr.f32.gmra.mxu0 %v284
        %v2151 = vpop.f32.mrf.mxu0
        %v2152 = vadd.f32 %v253, %v2151
        %v2153 = vpop.f32.mrf.mxu0
        %2154 = vmatprep.mubr.f32.mxu0 0.0
        %2155 = vmatmul.mubr.f32.gmra.mxu0 %v287
        %v2156 = vpop.f32.mrf.mxu0
        %v2157 = vadd.f32 %v258, %v2156
        %v2158 = vpop.f32.mrf.mxu0
        %2159 = vmatprep.mubr.f32.mxu0 0.0
        %2160 = vmatmul.mubr.f32.gmra.mxu0 %v290
        %v2161 = vpop.f32.mrf.mxu0
        %v2162 = vadd.f32 %v263, %v2161
        %v2163 = vpop.f32.mrf.mxu0
        %2164 = vmatprep.mubr.f32.mxu0 0.0
        %2165 = vmatmul.mubr.f32.gmra.mxu0 %v293
        %v2166 = vpop.f32.mrf.mxu0
        %v2167 = vadd.f32 %v268, %v2166
        %v2168 = vpop.f32.mrf.mxu0
        %2169 = vdwg.mxu0
        %2170 = vst [vmem:[%s207 + $0x78] sm:$0xff] %v2132
        %2171 = vst [vmem:[%s207 + $0xf8] sm:$0xff] %v2137
        %2172 = vst [vmem:[%s207 + $0x178] sm:$0xff] %v2142
        %2173 = vst [vmem:[%s207 + $0x1f8] sm:$0xff] %v2147
        %2174 = vst [vmem:[%s207 + $0x278] sm:$0xff] %v2152
        %2175 = vst [vmem:[%s207 + $0x2f8] sm:$0xff] %v2157
        %2176 = vst [vmem:[%s207 + $0x378] sm:$0xff] %v2162
        %2177 = vst [vmem:[%s207 + $0x3f8] sm:$0xff] %v2167
        %s2178 = sand.u32 %s112, 1
        %s2179 = scalar_lea.sflag [#allocation4], %s2178
        %s2180 = sand.u32 %s112, 1
        %s2181 = smul.addr %s2180, 1024
        %s2182 = scalar_lea.vmem [#allocation5], %s2181
        // Predicated region
        $region37: #{tpu_custom_call.1} parent=31 // pred_check
          %p2183 = pneg %p122
        $region38: #{tpu_custom_call.1} parent=31 // pred_check_branch
          %2185 = sbr.rel (%p2183) target = $region40
        $region39: #{tpu_custom_call.1} parent=31 // pred_region
          %s2186 = smul.u32 16, %s25
          %s2188 = ssub.s32 16384, 16384
          %2189 = vsyncadd %s2179, %s2188
          %s2190 = smul.addr %s24, 128
          %s2191 = sadd.s32 %s2186, %s2190
          %s2192 = smul.addr %s2191, 128
          %s2193 = scalar_lea.hbm %s3, %s2192
          %s2194 = sshll.u32 %s2182, 4
          %s2195 = int_to_ptr.vmem [resolvable:$true] %s2194
          %2200 = dma.vmem_to_hbm [thread:$0]  %s2195, 16384, %s2193, %s2179, 128, 128, 8
        $region40: #{tpu_custom_call.1} parent=31 // pred_fallthru
          _
      $region32: #{tpu_custom_call.1} parent=5 // pred_fallthru
        _
      %p2201 = scmp.le.s32.totalorder 2, %s15
      // Predicated region
      $region41: #{tpu_custom_call.1} parent=5 // pred_check
        %p2202 = pneg %p2201
      $region42: #{tpu_custom_call.1} parent=5 // pred_check_branch
        %2204 = sbr.rel (%p2202) target = $region44
      $region43: #{tpu_custom_call.1} parent=5 // pred_region
        %s2205 = ssub.s32 %s15, 2
        // Predicated region
        $region45: #{tpu_custom_call.1} parent=43 // pred_check
          %p2206 = pneg %p128
        $region46: #{tpu_custom_call.1} parent=43 // pred_check_branch
          %2208 = sbr.rel (%p2206) target = $region48
        $region47: #{tpu_custom_call.1} parent=43 // pred_region
          %s2209 = sand.u32 %s113, 1
          %s2210 = scalar_lea.sflag [#allocation4], %s2209
          %s2211 = sand.u32 %s113, 1
          %s2212 = smul.addr %s2211, 1024
          %s2213 = scalar_lea.vmem [#allocation5], %s2212
          %2214 = dma.done %s2210, 16384
        $region48: #{tpu_custom_call.1} parent=43 // pred_fallthru
          _
      $region44: #{tpu_custom_call.1} parent=5 // pred_fallthru
        _
    $region6: #{tpu_custom_call.1} parent=1 // loop_footer
      %s19 = sadd.s32 1, %s15
    $region7: #{tpu_custom_call.1} parent=1 // loop_footer_branch
      %14 = sbr.rel target = $region3
    $region8: #{tpu_custom_call.1} parent=1 // loop_exit
      _
    %2215 = vsyncpa [#allocation3], 1
    %s2216 = scalar_lea.sflag [#allocation3], 1
    %2217 = vsyncpa %s2216, 1
    %2218 = vsyncpa [#allocation4], 1
    %s2219 = scalar_lea.sflag [#allocation4], 1
    %2220 = vsyncpa %s2219, 1

</llo_original>
